<compile_context>
chip_gen: v5e
topology: v5e:2x2
jax: 0.10.0
libtpu: 0.0.40
codegen_flags: <defaults>
</compile_context>

<pallas_src>
import functools

import jax
import jax.numpy as jnp
from jax import lax
from jax.experimental import pallas as pl
from jax.experimental.pallas import tpu as pltpu


def gru_classify_kernel(tok_ref, tbl_ref, wh_hi_ref, wh_lo_ref, bhn_ref,
                        wc_ref, bc_ref, out_ref):
    TB = tok_ref.shape[0]
    Vp, G = tbl_ref.shape                 # padded vocab (128), packed gate width (128)
    H = wh_hi_ref.shape[0]                # true hidden size (32); gates at 0/H/2H
    B, Cp = out_ref.shape
    T = TB // B

    f32 = jnp.float32
    bf16 = jnp.bfloat16
    exact = jax.lax.Precision.HIGHEST

    # --- fused embedding lookup + input projection: one pre-loop MXU matmul ---
    # HIGHEST here reproduces the host-computed f32 table rows bit-exactly
    # (one-hot selection); it is off the serial critical path.
    tok = tok_ref[...]                                            # (T*B, 1) int32, time-major
    onehot = (lax.broadcasted_iota(jnp.int32, (TB, Vp), 1) == tok).astype(f32)
    xproj = jnp.dot(onehot, tbl_ref[...],
                    preferred_element_type=f32, precision=exact)  # (T*B, G), biases folded

    wh_hi = wh_hi_ref[...]                # (H, G) bf16   [W_hr|W_hz|W_hn] high half
    wh_lo = wh_lo_ref[...]                # (H, G) bf16   residual (low) half
    bhn = bhn_ref[...]                    # (1, G) f32, b_hn in the n-gate lanes only

    def hidden_matmul(h):
        # bf16_3x (== lax.Precision.HIGH) emulation of the f32 h @ W_h:
        # three native single-pass bf16 MXU matmuls with f32 accumulation,
        # instead of HIGHEST's ~6-pass f32 emulation on the serial path.
        h_hi = h.astype(bf16)
        h_lo = (h - h_hi.astype(f32)).astype(bf16)
        acc = jnp.dot(h_hi, wh_hi, preferred_element_type=f32)
        acc = acc + jnp.dot(h_hi, wh_lo, preferred_element_type=f32)
        acc = acc + jnp.dot(h_lo, wh_hi, preferred_element_type=f32)
        return acc

    h = jnp.zeros((B, H), f32)

    # Fully unrolled recurrence (static T) -> static slices, cross-step overlap
    # of EUP sigmoid/tanh with the next step's MXU pushes.
    for t in range(T):
        xp = xproj[t * B:(t + 1) * B, :]          # (B, G): gate block r|z|n at 0/H/2H
        hp = hidden_matmul(h) + bhn               # b_hn folded into the n-gate lanes
        r = jax.nn.sigmoid(xp[:, 0:H] + hp[:, 0:H])
        z = jax.nn.sigmoid(xp[:, H:2 * H] + hp[:, H:2 * H])
        n = jnp.tanh(xp[:, 2 * H:3 * H] + r * hp[:, 2 * H:3 * H])
        # Padded steps carry token id 0 whose table row saturates z to exactly
        # 1.0, so h_new == h (pack_padded_sequence semantics, no length mask).
        h = (1.0 - z) * n + z * h

    # Classifier + softmax; padded logit columns carry bias -1e30 (f32 only)
    # -> probability exactly 0.  One-time epilogue, kept at HIGHEST.
    logits = jnp.dot(h, wc_ref[...], preferred_element_type=f32,
                     precision=exact) + bc_ref[...]               # (B, Cp)
    m = jnp.max(logits, axis=-1, keepdims=True)
    e = jnp.exp(logits - m)
    out_ref[...] = e / jnp.sum(e, axis=-1, keepdims=True)


def init_params(key, vector_dim, vocab_size, num_classes):
    ks = jax.random.split(key, 16)
    s = 0.1
    D = H = vector_dim
    emb = s * jax.random.normal(ks[0], (vocab_size, D), jnp.float32)
    emb = emb.at[0].set(0.0)                  # padding_idx=0
    return dict(
        embedding=emb,
        w_ir=s * jax.random.normal(ks[1], (D, H), jnp.float32),
        w_iz=s * jax.random.normal(ks[2], (D, H), jnp.float32),
        w_in=s * jax.random.normal(ks[3], (D, H), jnp.float32),
        w_hr=s * jax.random.normal(ks[4], (H, H), jnp.float32),
        w_hz=s * jax.random.normal(ks[5], (H, H), jnp.float32),
        w_hn=s * jax.random.normal(ks[6], (H, H), jnp.float32),
        b_ir=s * jax.random.normal(ks[7], (1, H), jnp.float32),
        b_iz=s * jax.random.normal(ks[8], (1, H), jnp.float32),
        b_in=s * jax.random.normal(ks[9], (1, H), jnp.float32),
        b_hr=s * jax.random.normal(ks[10], (1, H), jnp.float32),
        b_hz=s * jax.random.normal(ks[11], (1, H), jnp.float32),
        b_hn=s * jax.random.normal(ks[12], (1, H), jnp.float32),
        w_cls=s * jax.random.normal(ks[13], (H, num_classes), jnp.float32),
        b_cls=s * jax.random.normal(ks[14], (1, num_classes), jnp.float32),
    )


def pack_params(params):
    """Host-side weight fusion / packing / padding (done once, outside the kernel)."""
    D, H = params["w_ir"].shape
    V = params["embedding"].shape[0]
    C = params["b_cls"].shape[-1]
    # Packed-gate layout needs all three gates inside one 128-lane block.
    # At H >= 128 fall back to one 128-lane block per gate.
    assert 3 * H <= 128, "packed-gate layout requires 3*H <= 128"
    G = 128                                   # single lane-dense gate block r|z|n
    Cp = ((C + 127) // 128) * 128
    Vp = ((V + 127) // 128) * 128             # lane-dense one-hot, K = 128 contraction
    hi = jax.lax.Precision.HIGHEST

    # Fused input projection; gates at lane offsets 0, H, 2H inside one block.
    wi3 = jnp.zeros((D, G), jnp.float32)
    wi3 = wi3.at[:, 0:H].set(params["w_ir"])
    wi3 = wi3.at[:, H:2 * H].set(params["w_iz"])
    wi3 = wi3.at[:, 2 * H:3 * H].set(params["w_in"])
    # Input-side bias with b_hr/b_hz folded in (b_hn stays inside the r* term).
    bi3 = jnp.zeros((1, G), jnp.float32)
    bi3 = bi3.at[:, 0:H].set(params["b_ir"] + params["b_hr"])
    bi3 = bi3.at[:, H:2 * H].set(params["b_iz"] + params["b_hz"])
    bi3 = bi3.at[:, 2 * H:3 * H].set(params["b_in"])
    # Fuse the embedding with the input projection: table[v] = emb[v]@Wi3 + bi3.
    emb_proj = jnp.dot(params["embedding"], wi3, precision=hi) + bi3
    table = jnp.zeros((Vp, G), jnp.float32).at[:V, :].set(emb_proj)
    # Length mask folded into the table: +1e4 on the z-gate columns of the pad
    # token (id 0) saturates z to exactly 1.0, so h is frozen on padded steps.
    # Valid because the wrapper forces token id 0 at every position t >= length.
    table = table.at[0, H:2 * H].add(1e4)

    # Fused hidden->hidden weights (H x G) pre-split into bf16 hi/lo halves for
    # the in-kernel bf16_3x (Precision.HIGH-equivalent) matmul.
    wh3 = jnp.zeros((H, G), jnp.float32)
    wh3 = wh3.at[:, 0:H].set(params["w_hr"])
    wh3 = wh3.at[:, H:2 * H].set(params["w_hz"])
    wh3 = wh3.at[:, 2 * H:3 * H].set(params["w_hn"])
    wh_hi = wh3.astype(jnp.bfloat16)
    wh_lo = (wh3 - wh_hi.astype(jnp.float32)).astype(jnp.bfloat16)
    bhn = jnp.zeros((1, G), jnp.float32).at[:, 2 * H:3 * H].set(params["b_hn"])

    # Classifier padded to a lane-dense 128-wide output; padded logits -> -1e30
    # (safe in f32 only; switch to a mask if logits ever move to bf16/fp8).
    wc = jnp.zeros((H, Cp), jnp.float32).at[:, :C].set(params["w_cls"])
    bc = jnp.full((1, Cp), -1e30, jnp.float32).at[:, :C].set(params["b_cls"])

    return dict(table=table, w_h_hi=wh_hi, w_h_lo=wh_lo, b_hn=bhn,
                w_cls=wc, b_cls=bc)


@functools.partial(jax.jit, static_argnames=("num_classes",))
def torch_model_forward(tokens, lengths, packed, *, num_classes):
    """tokens: (B, T) int32 ids (0 = pad); lengths: (B,) int32."""
    B, T = tokens.shape
    Cp = packed["w_cls"].shape[1]
    lengths = lengths.astype(jnp.int32)
    # Enforce the pad-token invariant required by the in-table length masking:
    # every position t >= lengths[b] must carry token id 0 (pack_padded_sequence
    # never processes those steps; here the saturated z-gate freezes h instead).
    pos = jnp.arange(T, dtype=jnp.int32)[None, :]
    tokens = jnp.where(pos < lengths[:, None], tokens.astype(jnp.int32), 0)
    tok_tm = jnp.transpose(tokens).reshape(T * B, 1)        # time-major ids

    probs_pad = pl.pallas_call(
        gru_classify_kernel,
        out_shape=jax.ShapeDtypeStruct((B, Cp), jnp.float32),
        # Single-block kernel: all operands (<1 MiB total) live in VMEM; no
        # grid / BlockSpecs needed — defaults DMA whole arrays once.
        # Explicit VMEM budget (well under v7x's 64 MiB physical / 32 MiB
        # scoped default) per the scaling note in the perf review.
        compiler_params=pltpu.CompilerParams(vmem_limit_bytes=16 * 1024 * 1024),
    )(tok_tm, packed["table"], packed["w_h_hi"], packed["w_h_lo"],
      packed["b_hn"], packed["w_cls"], packed["b_cls"])
    return probs_pad[:, :num_classes]


def reference_forward(x_tokens, lengths, params):
    """Pure-JAX reference with identical (PyTorch GRU) semantics."""
    hi = jax.lax.Precision.HIGHEST
    emb = params["embedding"]
    x = emb[x_tokens].astype(jnp.float32)                 # (B, T, D)
    B, T, D = x.shape
    h = jnp.zeros((B, D), jnp.float32)
    for t in range(T):
        x_t = x[:, t, :]
        r = jax.nn.sigmoid(jnp.dot(x_t, params["w_ir"], precision=hi) + params["b_ir"]
                           + jnp.dot(h, params["w_hr"], precision=hi) + params["b_hr"])
        z = jax.nn.sigmoid(jnp.dot(x_t, params["w_iz"], precision=hi) + params["b_iz"]
                           + jnp.dot(h, params["w_hz"], precision=hi) + params["b_hz"])
        n = jnp.tanh(jnp.dot(x_t, params["w_in"], precision=hi) + params["b_in"]
                     + r * (jnp.dot(h, params["w_hn"], precision=hi) + params["b_hn"]))
        h_new = (1.0 - z) * n + z * h
        mask = (t < lengths.astype(jnp.int32)).reshape(B, 1)
        h = jnp.where(mask, h_new, h)
    logits = jnp.dot(h, params["w_cls"], precision=hi) + params["b_cls"]
    return jax.nn.softmax(logits, axis=-1)


if __name__ == "__main__":
    vector_dim, vocab_size, num_classes = 32, 30, 5
    B, T = 8, 8

    key = jax.random.PRNGKey(0)
    kp, kx, kl = jax.random.split(key, 3)
    params = init_params(kp, vector_dim, vocab_size, num_classes)
    packed = pack_params(params)

    lengths = jax.random.randint(kl, (B,), 1, T + 1).astype(jnp.int32)
    tokens = jax.random.randint(kx, (B, T), 1, vocab_size).astype(jnp.int32)
    pos = jnp.arange(T)[None, :]
    tokens = jnp.where(pos < lengths[:, None], tokens, 0)   # pad token id = 0

    probs = torch_model_forward(tokens, lengths, packed, num_classes=num_classes)
    probs = jax.block_until_ready(probs)

    ref = reference_forward(tokens, lengths, params)
    assert probs.shape == (B, num_classes)
    assert jnp.allclose(jnp.sum(probs, axis=-1), 1.0, atol=1e-5)
    assert jnp.allclose(probs, ref, atol=1e-4, rtol=1e-4)

    print("KERNEL_OK")
</pallas_src>

<mosaic_0001>
module attributes {stable_mosaic.version = 11 : i64} {
  func.func @gru_classify_kernel(%arg0: memref<64x1xi32, #tpu.memory_space<vmem>>, %arg1: memref<128x128xf32, #tpu.memory_space<vmem>>, %arg2: memref<32x128xbf16, #tpu.memory_space<vmem>>, %arg3: memref<32x128xbf16, #tpu.memory_space<vmem>>, %arg4: memref<1x128xf32, #tpu.memory_space<vmem>>, %arg5: memref<32x128xf32, #tpu.memory_space<vmem>>, %arg6: memref<1x128xf32, #tpu.memory_space<vmem>>, %arg7: memref<8x128xf32, #tpu.memory_space<vmem>>) attributes {dimension_semantics = [], scalar_prefetch = 0 : i64, scratch_operands = 0 : i64, tpu.core_type = #tpu.core_type<tc>} {
    %c0 = arith.constant 0 : index
    %c0_0 = arith.constant 0 : index
    %0 = vector.load %arg0[%c0, %c0_0] : memref<64x1xi32, #tpu.memory_space<vmem>>, vector<64x1xi32>
    %1 = tpu.iota {dimensions = array<i32: 1>} : vector<64x128xi32>
    %2 = vector.broadcast %0 : vector<64x1xi32> to vector<64x128xi32>
    %3 = arith.cmpi eq, %1, %2 : vector<64x128xi32>
    %4 = arith.extui %3 : vector<64x128xi1> to vector<64x128xi32>
    %5 = arith.sitofp %4 : vector<64x128xi32> to vector<64x128xf32>
    %c0_1 = arith.constant 0 : index
    %c0_2 = arith.constant 0 : index
    %6 = vector.load %arg1[%c0_1, %c0_2] : memref<128x128xf32, #tpu.memory_space<vmem>>, vector<128x128xf32>
    %cst = arith.constant dense<0.000000e+00> : vector<64x128xf32>
    %7 = tpu.matmul %5, %6, %cst {dimension_numbers = #tpu.dot_dimension_numbers<[1], [0], [0], [1], [0, 0, 1, 1], [], []>, precision = #tpu.contract_precision<fp32>} : vector<64x128xf32>, vector<128x128xf32>, vector<64x128xf32> -> vector<64x128xf32>
    %c0_3 = arith.constant 0 : index
    %c0_4 = arith.constant 0 : index
    %8 = vector.load %arg2[%c0_3, %c0_4] : memref<32x128xbf16, #tpu.memory_space<vmem>>, vector<32x128xbf16>
    %c0_5 = arith.constant 0 : index
    %c0_6 = arith.constant 0 : index
    %9 = vector.load %arg3[%c0_5, %c0_6] : memref<32x128xbf16, #tpu.memory_space<vmem>>, vector<32x128xbf16>
    %c0_7 = arith.constant 0 : index
    %c0_8 = arith.constant 0 : index
    %10 = vector.load %arg4[%c0_7, %c0_8] : memref<1x128xf32, #tpu.memory_space<vmem>>, vector<1x128xf32>
    %cst_9 = arith.constant 0.000000e+00 : f32
    %11 = vector.broadcast %cst_9 : f32 to vector<8x32xf32>
    %12 = vector.extract_strided_slice %7 {offsets = [0, 0], sizes = [8, 128], strides = [1, 1]} : vector<64x128xf32> to vector<8x128xf32>
    %13 = arith.truncf %11 : vector<8x32xf32> to vector<8x32xbf16>
    %14 = arith.extf %13 : vector<8x32xbf16> to vector<8x32xf32>
    %15 = arith.subf %11, %14 : vector<8x32xf32>
    %16 = arith.truncf %15 : vector<8x32xf32> to vector<8x32xbf16>
    %cst_10 = arith.constant dense<0.000000e+00> : vector<8x128xf32>
    %17 = tpu.matmul %13, %8, %cst_10 {dimension_numbers = #tpu.dot_dimension_numbers<[1], [0], [0], [1], [0, 0, 1, 1], [], []>} : vector<8x32xbf16>, vector<32x128xbf16>, vector<8x128xf32> -> vector<8x128xf32>
    %cst_11 = arith.constant dense<0.000000e+00> : vector<8x128xf32>
    %18 = tpu.matmul %13, %9, %cst_11 {dimension_numbers = #tpu.dot_dimension_numbers<[1], [0], [0], [1], [0, 0, 1, 1], [], []>} : vector<8x32xbf16>, vector<32x128xbf16>, vector<8x128xf32> -> vector<8x128xf32>
    %19 = arith.addf %17, %18 : vector<8x128xf32>
    %cst_12 = arith.constant dense<0.000000e+00> : vector<8x128xf32>
    %20 = tpu.matmul %16, %8, %cst_12 {dimension_numbers = #tpu.dot_dimension_numbers<[1], [0], [0], [1], [0, 0, 1, 1], [], []>} : vector<8x32xbf16>, vector<32x128xbf16>, vector<8x128xf32> -> vector<8x128xf32>
    %21 = arith.addf %19, %20 : vector<8x128xf32>
    %22 = vector.broadcast %10 : vector<1x128xf32> to vector<8x128xf32>
    %23 = arith.addf %21, %22 : vector<8x128xf32>
    %24 = vector.extract_strided_slice %12 {offsets = [0, 0], sizes = [8, 32], strides = [1, 1]} : vector<8x128xf32> to vector<8x32xf32>
    %25 = vector.extract_strided_slice %23 {offsets = [0, 0], sizes = [8, 32], strides = [1, 1]} : vector<8x128xf32> to vector<8x32xf32>
    %26 = arith.addf %24, %25 : vector<8x32xf32>
    %27 = arith.negf %26 : vector<8x32xf32>
    %28 = math.exp %27 : vector<8x32xf32>
    %cst_13 = arith.constant 1.000000e+00 : f32
    %29 = vector.broadcast %cst_13 : f32 to vector<8x32xf32>
    %30 = arith.addf %29, %28 : vector<8x32xf32>
    %31 = arith.divf %29, %30 : vector<8x32xf32>
    %32 = vector.extract_strided_slice %12 {offsets = [0, 32], sizes = [8, 32], strides = [1, 1]} : vector<8x128xf32> to vector<8x32xf32>
    %33 = vector.extract_strided_slice %23 {offsets = [0, 32], sizes = [8, 32], strides = [1, 1]} : vector<8x128xf32> to vector<8x32xf32>
    %34 = arith.addf %32, %33 : vector<8x32xf32>
    %35 = arith.negf %34 : vector<8x32xf32>
    %36 = math.exp %35 : vector<8x32xf32>
    %cst_14 = arith.constant 1.000000e+00 : f32
    %37 = vector.broadcast %cst_14 : f32 to vector<8x32xf32>
    %38 = arith.addf %37, %36 : vector<8x32xf32>
    %39 = arith.divf %37, %38 : vector<8x32xf32>
    %40 = vector.extract_strided_slice %12 {offsets = [0, 64], sizes = [8, 32], strides = [1, 1]} : vector<8x128xf32> to vector<8x32xf32>
    %41 = vector.extract_strided_slice %23 {offsets = [0, 64], sizes = [8, 32], strides = [1, 1]} : vector<8x128xf32> to vector<8x32xf32>
    %42 = arith.mulf %31, %41 : vector<8x32xf32>
    %43 = arith.addf %40, %42 : vector<8x32xf32>
    %44 = math.tanh %43 : vector<8x32xf32>
    %cst_15 = arith.constant 1.000000e+00 : f32
    %45 = vector.broadcast %cst_15 : f32 to vector<8x32xf32>
    %46 = arith.subf %45, %39 : vector<8x32xf32>
    %47 = arith.mulf %46, %44 : vector<8x32xf32>
    %48 = arith.mulf %39, %11 : vector<8x32xf32>
    %49 = arith.addf %47, %48 : vector<8x32xf32>
    %50 = vector.extract_strided_slice %7 {offsets = [8, 0], sizes = [8, 128], strides = [1, 1]} : vector<64x128xf32> to vector<8x128xf32>
    %51 = arith.truncf %49 : vector<8x32xf32> to vector<8x32xbf16>
    %52 = arith.extf %51 : vector<8x32xbf16> to vector<8x32xf32>
    %53 = arith.subf %49, %52 : vector<8x32xf32>
    %54 = arith.truncf %53 : vector<8x32xf32> to vector<8x32xbf16>
    %cst_16 = arith.constant dense<0.000000e+00> : vector<8x128xf32>
    %55 = tpu.matmul %51, %8, %cst_16 {dimension_numbers = #tpu.dot_dimension_numbers<[1], [0], [0], [1], [0, 0, 1, 1], [], []>} : vector<8x32xbf16>, vector<32x128xbf16>, vector<8x128xf32> -> vector<8x128xf32>
    %cst_17 = arith.constant dense<0.000000e+00> : vector<8x128xf32>
    %56 = tpu.matmul %51, %9, %cst_17 {dimension_numbers = #tpu.dot_dimension_numbers<[1], [0], [0], [1], [0, 0, 1, 1], [], []>} : vector<8x32xbf16>, vector<32x128xbf16>, vector<8x128xf32> -> vector<8x128xf32>
    %57 = arith.addf %55, %56 : vector<8x128xf32>
    %cst_18 = arith.constant dense<0.000000e+00> : vector<8x128xf32>
    %58 = tpu.matmul %54, %8, %cst_18 {dimension_numbers = #tpu.dot_dimension_numbers<[1], [0], [0], [1], [0, 0, 1, 1], [], []>} : vector<8x32xbf16>, vector<32x128xbf16>, vector<8x128xf32> -> vector<8x128xf32>
    %59 = arith.addf %57, %58 : vector<8x128xf32>
    %60 = vector.broadcast %10 : vector<1x128xf32> to vector<8x128xf32>
    %61 = arith.addf %59, %60 : vector<8x128xf32>
    %62 = vector.extract_strided_slice %50 {offsets = [0, 0], sizes = [8, 32], strides = [1, 1]} : vector<8x128xf32> to vector<8x32xf32>
    %63 = vector.extract_strided_slice %61 {offsets = [0, 0], sizes = [8, 32], strides = [1, 1]} : vector<8x128xf32> to vector<8x32xf32>
    %64 = arith.addf %62, %63 : vector<8x32xf32>
    %65 = arith.negf %64 : vector<8x32xf32>
    %66 = math.exp %65 : vector<8x32xf32>
    %cst_19 = arith.constant 1.000000e+00 : f32
    %67 = vector.broadcast %cst_19 : f32 to vector<8x32xf32>
    %68 = arith.addf %67, %66 : vector<8x32xf32>
    %69 = arith.divf %67, %68 : vector<8x32xf32>
    %70 = vector.extract_strided_slice %50 {offsets = [0, 32], sizes = [8, 32], strides = [1, 1]} : vector<8x128xf32> to vector<8x32xf32>
    %71 = vector.extract_strided_slice %61 {offsets = [0, 32], sizes = [8, 32], strides = [1, 1]} : vector<8x128xf32> to vector<8x32xf32>
    %72 = arith.addf %70, %71 : vector<8x32xf32>
    %73 = arith.negf %72 : vector<8x32xf32>
    %74 = math.exp %73 : vector<8x32xf32>
    %cst_20 = arith.constant 1.000000e+00 : f32
    %75 = vector.broadcast %cst_20 : f32 to vector<8x32xf32>
    %76 = arith.addf %75, %74 : vector<8x32xf32>
    %77 = arith.divf %75, %76 : vector<8x32xf32>
    %78 = vector.extract_strided_slice %50 {offsets = [0, 64], sizes = [8, 32], strides = [1, 1]} : vector<8x128xf32> to vector<8x32xf32>
    %79 = vector.extract_strided_slice %61 {offsets = [0, 64], sizes = [8, 32], strides = [1, 1]} : vector<8x128xf32> to vector<8x32xf32>
    %80 = arith.mulf %69, %79 : vector<8x32xf32>
    %81 = arith.addf %78, %80 : vector<8x32xf32>
    %82 = math.tanh %81 : vector<8x32xf32>
    %cst_21 = arith.constant 1.000000e+00 : f32
    %83 = vector.broadcast %cst_21 : f32 to vector<8x32xf32>
    %84 = arith.subf %83, %77 : vector<8x32xf32>
    %85 = arith.mulf %84, %82 : vector<8x32xf32>
    %86 = arith.mulf %77, %49 : vector<8x32xf32>
    %87 = arith.addf %85, %86 : vector<8x32xf32>
    %88 = vector.extract_strided_slice %7 {offsets = [16, 0], sizes = [8, 128], strides = [1, 1]} : vector<64x128xf32> to vector<8x128xf32>
    %89 = arith.truncf %87 : vector<8x32xf32> to vector<8x32xbf16>
    %90 = arith.extf %89 : vector<8x32xbf16> to vector<8x32xf32>
    %91 = arith.subf %87, %90 : vector<8x32xf32>
    %92 = arith.truncf %91 : vector<8x32xf32> to vector<8x32xbf16>
    %cst_22 = arith.constant dense<0.000000e+00> : vector<8x128xf32>
    %93 = tpu.matmul %89, %8, %cst_22 {dimension_numbers = #tpu.dot_dimension_numbers<[1], [0], [0], [1], [0, 0, 1, 1], [], []>} : vector<8x32xbf16>, vector<32x128xbf16>, vector<8x128xf32> -> vector<8x128xf32>
    %cst_23 = arith.constant dense<0.000000e+00> : vector<8x128xf32>
    %94 = tpu.matmul %89, %9, %cst_23 {dimension_numbers = #tpu.dot_dimension_numbers<[1], [0], [0], [1], [0, 0, 1, 1], [], []>} : vector<8x32xbf16>, vector<32x128xbf16>, vector<8x128xf32> -> vector<8x128xf32>
    %95 = arith.addf %93, %94 : vector<8x128xf32>
    %cst_24 = arith.constant dense<0.000000e+00> : vector<8x128xf32>
    %96 = tpu.matmul %92, %8, %cst_24 {dimension_numbers = #tpu.dot_dimension_numbers<[1], [0], [0], [1], [0, 0, 1, 1], [], []>} : vector<8x32xbf16>, vector<32x128xbf16>, vector<8x128xf32> -> vector<8x128xf32>
    %97 = arith.addf %95, %96 : vector<8x128xf32>
    %98 = vector.broadcast %10 : vector<1x128xf32> to vector<8x128xf32>
    %99 = arith.addf %97, %98 : vector<8x128xf32>
    %100 = vector.extract_strided_slice %88 {offsets = [0, 0], sizes = [8, 32], strides = [1, 1]} : vector<8x128xf32> to vector<8x32xf32>
    %101 = vector.extract_strided_slice %99 {offsets = [0, 0], sizes = [8, 32], strides = [1, 1]} : vector<8x128xf32> to vector<8x32xf32>
    %102 = arith.addf %100, %101 : vector<8x32xf32>
    %103 = arith.negf %102 : vector<8x32xf32>
    %104 = math.exp %103 : vector<8x32xf32>
    %cst_25 = arith.constant 1.000000e+00 : f32
    %105 = vector.broadcast %cst_25 : f32 to vector<8x32xf32>
    %106 = arith.addf %105, %104 : vector<8x32xf32>
    %107 = arith.divf %105, %106 : vector<8x32xf32>
    %108 = vector.extract_strided_slice %88 {offsets = [0, 32], sizes = [8, 32], strides = [1, 1]} : vector<8x128xf32> to vector<8x32xf32>
    %109 = vector.extract_strided_slice %99 {offsets = [0, 32], sizes = [8, 32], strides = [1, 1]} : vector<8x128xf32> to vector<8x32xf32>
    %110 = arith.addf %108, %109 : vector<8x32xf32>
    %111 = arith.negf %110 : vector<8x32xf32>
    %112 = math.exp %111 : vector<8x32xf32>
    %cst_26 = arith.constant 1.000000e+00 : f32
    %113 = vector.broadcast %cst_26 : f32 to vector<8x32xf32>
    %114 = arith.addf %113, %112 : vector<8x32xf32>
    %115 = arith.divf %113, %114 : vector<8x32xf32>
    %116 = vector.extract_strided_slice %88 {offsets = [0, 64], sizes = [8, 32], strides = [1, 1]} : vector<8x128xf32> to vector<8x32xf32>
    %117 = vector.extract_strided_slice %99 {offsets = [0, 64], sizes = [8, 32], strides = [1, 1]} : vector<8x128xf32> to vector<8x32xf32>
    %118 = arith.mulf %107, %117 : vector<8x32xf32>
    %119 = arith.addf %116, %118 : vector<8x32xf32>
    %120 = math.tanh %119 : vector<8x32xf32>
    %cst_27 = arith.constant 1.000000e+00 : f32
    %121 = vector.broadcast %cst_27 : f32 to vector<8x32xf32>
    %122 = arith.subf %121, %115 : vector<8x32xf32>
    %123 = arith.mulf %122, %120 : vector<8x32xf32>
    %124 = arith.mulf %115, %87 : vector<8x32xf32>
    %125 = arith.addf %123, %124 : vector<8x32xf32>
    %126 = vector.extract_strided_slice %7 {offsets = [24, 0], sizes = [8, 128], strides = [1, 1]} : vector<64x128xf32> to vector<8x128xf32>
    %127 = arith.truncf %125 : vector<8x32xf32> to vector<8x32xbf16>
    %128 = arith.extf %127 : vector<8x32xbf16> to vector<8x32xf32>
    %129 = arith.subf %125, %128 : vector<8x32xf32>
    %130 = arith.truncf %129 : vector<8x32xf32> to vector<8x32xbf16>
    %cst_28 = arith.constant dense<0.000000e+00> : vector<8x128xf32>
    %131 = tpu.matmul %127, %8, %cst_28 {dimension_numbers = #tpu.dot_dimension_numbers<[1], [0], [0], [1], [0, 0, 1, 1], [], []>} : vector<8x32xbf16>, vector<32x128xbf16>, vector<8x128xf32> -> vector<8x128xf32>
    %cst_29 = arith.constant dense<0.000000e+00> : vector<8x128xf32>
    %132 = tpu.matmul %127, %9, %cst_29 {dimension_numbers = #tpu.dot_dimension_numbers<[1], [0], [0], [1], [0, 0, 1, 1], [], []>} : vector<8x32xbf16>, vector<32x128xbf16>, vector<8x128xf32> -> vector<8x128xf32>
    %133 = arith.addf %131, %132 : vector<8x128xf32>
    %cst_30 = arith.constant dense<0.000000e+00> : vector<8x128xf32>
    %134 = tpu.matmul %130, %8, %cst_30 {dimension_numbers = #tpu.dot_dimension_numbers<[1], [0], [0], [1], [0, 0, 1, 1], [], []>} : vector<8x32xbf16>, vector<32x128xbf16>, vector<8x128xf32> -> vector<8x128xf32>
    %135 = arith.addf %133, %134 : vector<8x128xf32>
    %136 = vector.broadcast %10 : vector<1x128xf32> to vector<8x128xf32>
    %137 = arith.addf %135, %136 : vector<8x128xf32>
    %138 = vector.extract_strided_slice %126 {offsets = [0, 0], sizes = [8, 32], strides = [1, 1]} : vector<8x128xf32> to vector<8x32xf32>
    %139 = vector.extract_strided_slice %137 {offsets = [0, 0], sizes = [8, 32], strides = [1, 1]} : vector<8x128xf32> to vector<8x32xf32>
    %140 = arith.addf %138, %139 : vector<8x32xf32>
    %141 = arith.negf %140 : vector<8x32xf32>
    %142 = math.exp %141 : vector<8x32xf32>
    %cst_31 = arith.constant 1.000000e+00 : f32
    %143 = vector.broadcast %cst_31 : f32 to vector<8x32xf32>
    %144 = arith.addf %143, %142 : vector<8x32xf32>
    %145 = arith.divf %143, %144 : vector<8x32xf32>
    %146 = vector.extract_strided_slice %126 {offsets = [0, 32], sizes = [8, 32], strides = [1, 1]} : vector<8x128xf32> to vector<8x32xf32>
    %147 = vector.extract_strided_slice %137 {offsets = [0, 32], sizes = [8, 32], strides = [1, 1]} : vector<8x128xf32> to vector<8x32xf32>
    %148 = arith.addf %146, %147 : vector<8x32xf32>
    %149 = arith.negf %148 : vector<8x32xf32>
    %150 = math.exp %149 : vector<8x32xf32>
    %cst_32 = arith.constant 1.000000e+00 : f32
    %151 = vector.broadcast %cst_32 : f32 to vector<8x32xf32>
    %152 = arith.addf %151, %150 : vector<8x32xf32>
    %153 = arith.divf %151, %152 : vector<8x32xf32>
    %154 = vector.extract_strided_slice %126 {offsets = [0, 64], sizes = [8, 32], strides = [1, 1]} : vector<8x128xf32> to vector<8x32xf32>
    %155 = vector.extract_strided_slice %137 {offsets = [0, 64], sizes = [8, 32], strides = [1, 1]} : vector<8x128xf32> to vector<8x32xf32>
    %156 = arith.mulf %145, %155 : vector<8x32xf32>
    %157 = arith.addf %154, %156 : vector<8x32xf32>
    %158 = math.tanh %157 : vector<8x32xf32>
    %cst_33 = arith.constant 1.000000e+00 : f32
    %159 = vector.broadcast %cst_33 : f32 to vector<8x32xf32>
    %160 = arith.subf %159, %153 : vector<8x32xf32>
    %161 = arith.mulf %160, %158 : vector<8x32xf32>
    %162 = arith.mulf %153, %125 : vector<8x32xf32>
    %163 = arith.addf %161, %162 : vector<8x32xf32>
    %164 = vector.extract_strided_slice %7 {offsets = [32, 0], sizes = [8, 128], strides = [1, 1]} : vector<64x128xf32> to vector<8x128xf32>
    %165 = arith.truncf %163 : vector<8x32xf32> to vector<8x32xbf16>
    %166 = arith.extf %165 : vector<8x32xbf16> to vector<8x32xf32>
    %167 = arith.subf %163, %166 : vector<8x32xf32>
    %168 = arith.truncf %167 : vector<8x32xf32> to vector<8x32xbf16>
    %cst_34 = arith.constant dense<0.000000e+00> : vector<8x128xf32>
    %169 = tpu.matmul %165, %8, %cst_34 {dimension_numbers = #tpu.dot_dimension_numbers<[1], [0], [0], [1], [0, 0, 1, 1], [], []>} : vector<8x32xbf16>, vector<32x128xbf16>, vector<8x128xf32> -> vector<8x128xf32>
    %cst_35 = arith.constant dense<0.000000e+00> : vector<8x128xf32>
    %170 = tpu.matmul %165, %9, %cst_35 {dimension_numbers = #tpu.dot_dimension_numbers<[1], [0], [0], [1], [0, 0, 1, 1], [], []>} : vector<8x32xbf16>, vector<32x128xbf16>, vector<8x128xf32> -> vector<8x128xf32>
    %171 = arith.addf %169, %170 : vector<8x128xf32>
    %cst_36 = arith.constant dense<0.000000e+00> : vector<8x128xf32>
    %172 = tpu.matmul %168, %8, %cst_36 {dimension_numbers = #tpu.dot_dimension_numbers<[1], [0], [0], [1], [0, 0, 1, 1], [], []>} : vector<8x32xbf16>, vector<32x128xbf16>, vector<8x128xf32> -> vector<8x128xf32>
    %173 = arith.addf %171, %172 : vector<8x128xf32>
    %174 = vector.broadcast %10 : vector<1x128xf32> to vector<8x128xf32>
    %175 = arith.addf %173, %174 : vector<8x128xf32>
    %176 = vector.extract_strided_slice %164 {offsets = [0, 0], sizes = [8, 32], strides = [1, 1]} : vector<8x128xf32> to vector<8x32xf32>
    %177 = vector.extract_strided_slice %175 {offsets = [0, 0], sizes = [8, 32], strides = [1, 1]} : vector<8x128xf32> to vector<8x32xf32>
    %178 = arith.addf %176, %177 : vector<8x32xf32>
    %179 = arith.negf %178 : vector<8x32xf32>
    %180 = math.exp %179 : vector<8x32xf32>
    %cst_37 = arith.constant 1.000000e+00 : f32
    %181 = vector.broadcast %cst_37 : f32 to vector<8x32xf32>
    %182 = arith.addf %181, %180 : vector<8x32xf32>
    %183 = arith.divf %181, %182 : vector<8x32xf32>
    %184 = vector.extract_strided_slice %164 {offsets = [0, 32], sizes = [8, 32], strides = [1, 1]} : vector<8x128xf32> to vector<8x32xf32>
    %185 = vector.extract_strided_slice %175 {offsets = [0, 32], sizes = [8, 32], strides = [1, 1]} : vector<8x128xf32> to vector<8x32xf32>
    %186 = arith.addf %184, %185 : vector<8x32xf32>
    %187 = arith.negf %186 : vector<8x32xf32>
    %188 = math.exp %187 : vector<8x32xf32>
    %cst_38 = arith.constant 1.000000e+00 : f32
    %189 = vector.broadcast %cst_38 : f32 to vector<8x32xf32>
    %190 = arith.addf %189, %188 : vector<8x32xf32>
    %191 = arith.divf %189, %190 : vector<8x32xf32>
    %192 = vector.extract_strided_slice %164 {offsets = [0, 64], sizes = [8, 32], strides = [1, 1]} : vector<8x128xf32> to vector<8x32xf32>
    %193 = vector.extract_strided_slice %175 {offsets = [0, 64], sizes = [8, 32], strides = [1, 1]} : vector<8x128xf32> to vector<8x32xf32>
    %194 = arith.mulf %183, %193 : vector<8x32xf32>
    %195 = arith.addf %192, %194 : vector<8x32xf32>
    %196 = math.tanh %195 : vector<8x32xf32>
    %cst_39 = arith.constant 1.000000e+00 : f32
    %197 = vector.broadcast %cst_39 : f32 to vector<8x32xf32>
    %198 = arith.subf %197, %191 : vector<8x32xf32>
    %199 = arith.mulf %198, %196 : vector<8x32xf32>
    %200 = arith.mulf %191, %163 : vector<8x32xf32>
    %201 = arith.addf %199, %200 : vector<8x32xf32>
    %202 = vector.extract_strided_slice %7 {offsets = [40, 0], sizes = [8, 128], strides = [1, 1]} : vector<64x128xf32> to vector<8x128xf32>
    %203 = arith.truncf %201 : vector<8x32xf32> to vector<8x32xbf16>
    %204 = arith.extf %203 : vector<8x32xbf16> to vector<8x32xf32>
    %205 = arith.subf %201, %204 : vector<8x32xf32>
    %206 = arith.truncf %205 : vector<8x32xf32> to vector<8x32xbf16>
    %cst_40 = arith.constant dense<0.000000e+00> : vector<8x128xf32>
    %207 = tpu.matmul %203, %8, %cst_40 {dimension_numbers = #tpu.dot_dimension_numbers<[1], [0], [0], [1], [0, 0, 1, 1], [], []>} : vector<8x32xbf16>, vector<32x128xbf16>, vector<8x128xf32> -> vector<8x128xf32>
    %cst_41 = arith.constant dense<0.000000e+00> : vector<8x128xf32>
    %208 = tpu.matmul %203, %9, %cst_41 {dimension_numbers = #tpu.dot_dimension_numbers<[1], [0], [0], [1], [0, 0, 1, 1], [], []>} : vector<8x32xbf16>, vector<32x128xbf16>, vector<8x128xf32> -> vector<8x128xf32>
    %209 = arith.addf %207, %208 : vector<8x128xf32>
    %cst_42 = arith.constant dense<0.000000e+00> : vector<8x128xf32>
    %210 = tpu.matmul %206, %8, %cst_42 {dimension_numbers = #tpu.dot_dimension_numbers<[1], [0], [0], [1], [0, 0, 1, 1], [], []>} : vector<8x32xbf16>, vector<32x128xbf16>, vector<8x128xf32> -> vector<8x128xf32>
    %211 = arith.addf %209, %210 : vector<8x128xf32>
    %212 = vector.broadcast %10 : vector<1x128xf32> to vector<8x128xf32>
    %213 = arith.addf %211, %212 : vector<8x128xf32>
    %214 = vector.extract_strided_slice %202 {offsets = [0, 0], sizes = [8, 32], strides = [1, 1]} : vector<8x128xf32> to vector<8x32xf32>
    %215 = vector.extract_strided_slice %213 {offsets = [0, 0], sizes = [8, 32], strides = [1, 1]} : vector<8x128xf32> to vector<8x32xf32>
    %216 = arith.addf %214, %215 : vector<8x32xf32>
    %217 = arith.negf %216 : vector<8x32xf32>
    %218 = math.exp %217 : vector<8x32xf32>
    %cst_43 = arith.constant 1.000000e+00 : f32
    %219 = vector.broadcast %cst_43 : f32 to vector<8x32xf32>
    %220 = arith.addf %219, %218 : vector<8x32xf32>
    %221 = arith.divf %219, %220 : vector<8x32xf32>
    %222 = vector.extract_strided_slice %202 {offsets = [0, 32], sizes = [8, 32], strides = [1, 1]} : vector<8x128xf32> to vector<8x32xf32>
    %223 = vector.extract_strided_slice %213 {offsets = [0, 32], sizes = [8, 32], strides = [1, 1]} : vector<8x128xf32> to vector<8x32xf32>
    %224 = arith.addf %222, %223 : vector<8x32xf32>
    %225 = arith.negf %224 : vector<8x32xf32>
    %226 = math.exp %225 : vector<8x32xf32>
    %cst_44 = arith.constant 1.000000e+00 : f32
    %227 = vector.broadcast %cst_44 : f32 to vector<8x32xf32>
    %228 = arith.addf %227, %226 : vector<8x32xf32>
    %229 = arith.divf %227, %228 : vector<8x32xf32>
    %230 = vector.extract_strided_slice %202 {offsets = [0, 64], sizes = [8, 32], strides = [1, 1]} : vector<8x128xf32> to vector<8x32xf32>
    %231 = vector.extract_strided_slice %213 {offsets = [0, 64], sizes = [8, 32], strides = [1, 1]} : vector<8x128xf32> to vector<8x32xf32>
    %232 = arith.mulf %221, %231 : vector<8x32xf32>
    %233 = arith.addf %230, %232 : vector<8x32xf32>
    %234 = math.tanh %233 : vector<8x32xf32>
    %cst_45 = arith.constant 1.000000e+00 : f32
    %235 = vector.broadcast %cst_45 : f32 to vector<8x32xf32>
    %236 = arith.subf %235, %229 : vector<8x32xf32>
    %237 = arith.mulf %236, %234 : vector<8x32xf32>
    %238 = arith.mulf %229, %201 : vector<8x32xf32>
    %239 = arith.addf %237, %238 : vector<8x32xf32>
    %240 = vector.extract_strided_slice %7 {offsets = [48, 0], sizes = [8, 128], strides = [1, 1]} : vector<64x128xf32> to vector<8x128xf32>
    %241 = arith.truncf %239 : vector<8x32xf32> to vector<8x32xbf16>
    %242 = arith.extf %241 : vector<8x32xbf16> to vector<8x32xf32>
    %243 = arith.subf %239, %242 : vector<8x32xf32>
    %244 = arith.truncf %243 : vector<8x32xf32> to vector<8x32xbf16>
    %cst_46 = arith.constant dense<0.000000e+00> : vector<8x128xf32>
    %245 = tpu.matmul %241, %8, %cst_46 {dimension_numbers = #tpu.dot_dimension_numbers<[1], [0], [0], [1], [0, 0, 1, 1], [], []>} : vector<8x32xbf16>, vector<32x128xbf16>, vector<8x128xf32> -> vector<8x128xf32>
    %cst_47 = arith.constant dense<0.000000e+00> : vector<8x128xf32>
    %246 = tpu.matmul %241, %9, %cst_47 {dimension_numbers = #tpu.dot_dimension_numbers<[1], [0], [0], [1], [0, 0, 1, 1], [], []>} : vector<8x32xbf16>, vector<32x128xbf16>, vector<8x128xf32> -> vector<8x128xf32>
    %247 = arith.addf %245, %246 : vector<8x128xf32>
    %cst_48 = arith.constant dense<0.000000e+00> : vector<8x128xf32>
    %248 = tpu.matmul %244, %8, %cst_48 {dimension_numbers = #tpu.dot_dimension_numbers<[1], [0], [0], [1], [0, 0, 1, 1], [], []>} : vector<8x32xbf16>, vector<32x128xbf16>, vector<8x128xf32> -> vector<8x128xf32>
    %249 = arith.addf %247, %248 : vector<8x128xf32>
    %250 = vector.broadcast %10 : vector<1x128xf32> to vector<8x128xf32>
    %251 = arith.addf %249, %250 : vector<8x128xf32>
    %252 = vector.extract_strided_slice %240 {offsets = [0, 0], sizes = [8, 32], strides = [1, 1]} : vector<8x128xf32> to vector<8x32xf32>
    %253 = vector.extract_strided_slice %251 {offsets = [0, 0], sizes = [8, 32], strides = [1, 1]} : vector<8x128xf32> to vector<8x32xf32>
    %254 = arith.addf %252, %253 : vector<8x32xf32>
    %255 = arith.negf %254 : vector<8x32xf32>
    %256 = math.exp %255 : vector<8x32xf32>
    %cst_49 = arith.constant 1.000000e+00 : f32
    %257 = vector.broadcast %cst_49 : f32 to vector<8x32xf32>
    %258 = arith.addf %257, %256 : vector<8x32xf32>
    %259 = arith.divf %257, %258 : vector<8x32xf32>
    %260 = vector.extract_strided_slice %240 {offsets = [0, 32], sizes = [8, 32], strides = [1, 1]} : vector<8x128xf32> to vector<8x32xf32>
    %261 = vector.extract_strided_slice %251 {offsets = [0, 32], sizes = [8, 32], strides = [1, 1]} : vector<8x128xf32> to vector<8x32xf32>
    %262 = arith.addf %260, %261 : vector<8x32xf32>
    %263 = arith.negf %262 : vector<8x32xf32>
    %264 = math.exp %263 : vector<8x32xf32>
    %cst_50 = arith.constant 1.000000e+00 : f32
    %265 = vector.broadcast %cst_50 : f32 to vector<8x32xf32>
    %266 = arith.addf %265, %264 : vector<8x32xf32>
    %267 = arith.divf %265, %266 : vector<8x32xf32>
    %268 = vector.extract_strided_slice %240 {offsets = [0, 64], sizes = [8, 32], strides = [1, 1]} : vector<8x128xf32> to vector<8x32xf32>
    %269 = vector.extract_strided_slice %251 {offsets = [0, 64], sizes = [8, 32], strides = [1, 1]} : vector<8x128xf32> to vector<8x32xf32>
    %270 = arith.mulf %259, %269 : vector<8x32xf32>
    %271 = arith.addf %268, %270 : vector<8x32xf32>
    %272 = math.tanh %271 : vector<8x32xf32>
    %cst_51 = arith.constant 1.000000e+00 : f32
    %273 = vector.broadcast %cst_51 : f32 to vector<8x32xf32>
    %274 = arith.subf %273, %267 : vector<8x32xf32>
    %275 = arith.mulf %274, %272 : vector<8x32xf32>
    %276 = arith.mulf %267, %239 : vector<8x32xf32>
    %277 = arith.addf %275, %276 : vector<8x32xf32>
    %278 = vector.extract_strided_slice %7 {offsets = [56, 0], sizes = [8, 128], strides = [1, 1]} : vector<64x128xf32> to vector<8x128xf32>
    %279 = arith.truncf %277 : vector<8x32xf32> to vector<8x32xbf16>
    %280 = arith.extf %279 : vector<8x32xbf16> to vector<8x32xf32>
    %281 = arith.subf %277, %280 : vector<8x32xf32>
    %282 = arith.truncf %281 : vector<8x32xf32> to vector<8x32xbf16>
    %cst_52 = arith.constant dense<0.000000e+00> : vector<8x128xf32>
    %283 = tpu.matmul %279, %8, %cst_52 {dimension_numbers = #tpu.dot_dimension_numbers<[1], [0], [0], [1], [0, 0, 1, 1], [], []>} : vector<8x32xbf16>, vector<32x128xbf16>, vector<8x128xf32> -> vector<8x128xf32>
    %cst_53 = arith.constant dense<0.000000e+00> : vector<8x128xf32>
    %284 = tpu.matmul %279, %9, %cst_53 {dimension_numbers = #tpu.dot_dimension_numbers<[1], [0], [0], [1], [0, 0, 1, 1], [], []>} : vector<8x32xbf16>, vector<32x128xbf16>, vector<8x128xf32> -> vector<8x128xf32>
    %285 = arith.addf %283, %284 : vector<8x128xf32>
    %cst_54 = arith.constant dense<0.000000e+00> : vector<8x128xf32>
    %286 = tpu.matmul %282, %8, %cst_54 {dimension_numbers = #tpu.dot_dimension_numbers<[1], [0], [0], [1], [0, 0, 1, 1], [], []>} : vector<8x32xbf16>, vector<32x128xbf16>, vector<8x128xf32> -> vector<8x128xf32>
    %287 = arith.addf %285, %286 : vector<8x128xf32>
    %288 = vector.broadcast %10 : vector<1x128xf32> to vector<8x128xf32>
    %289 = arith.addf %287, %288 : vector<8x128xf32>
    %290 = vector.extract_strided_slice %278 {offsets = [0, 0], sizes = [8, 32], strides = [1, 1]} : vector<8x128xf32> to vector<8x32xf32>
    %291 = vector.extract_strided_slice %289 {offsets = [0, 0], sizes = [8, 32], strides = [1, 1]} : vector<8x128xf32> to vector<8x32xf32>
    %292 = arith.addf %290, %291 : vector<8x32xf32>
    %293 = arith.negf %292 : vector<8x32xf32>
    %294 = math.exp %293 : vector<8x32xf32>
    %cst_55 = arith.constant 1.000000e+00 : f32
    %295 = vector.broadcast %cst_55 : f32 to vector<8x32xf32>
    %296 = arith.addf %295, %294 : vector<8x32xf32>
    %297 = arith.divf %295, %296 : vector<8x32xf32>
    %298 = vector.extract_strided_slice %278 {offsets = [0, 32], sizes = [8, 32], strides = [1, 1]} : vector<8x128xf32> to vector<8x32xf32>
    %299 = vector.extract_strided_slice %289 {offsets = [0, 32], sizes = [8, 32], strides = [1, 1]} : vector<8x128xf32> to vector<8x32xf32>
    %300 = arith.addf %298, %299 : vector<8x32xf32>
    %301 = arith.negf %300 : vector<8x32xf32>
    %302 = math.exp %301 : vector<8x32xf32>
    %cst_56 = arith.constant 1.000000e+00 : f32
    %303 = vector.broadcast %cst_56 : f32 to vector<8x32xf32>
    %304 = arith.addf %303, %302 : vector<8x32xf32>
    %305 = arith.divf %303, %304 : vector<8x32xf32>
    %306 = vector.extract_strided_slice %278 {offsets = [0, 64], sizes = [8, 32], strides = [1, 1]} : vector<8x128xf32> to vector<8x32xf32>
    %307 = vector.extract_strided_slice %289 {offsets = [0, 64], sizes = [8, 32], strides = [1, 1]} : vector<8x128xf32> to vector<8x32xf32>
    %308 = arith.mulf %297, %307 : vector<8x32xf32>
    %309 = arith.addf %306, %308 : vector<8x32xf32>
    %310 = math.tanh %309 : vector<8x32xf32>
    %cst_57 = arith.constant 1.000000e+00 : f32
    %311 = vector.broadcast %cst_57 : f32 to vector<8x32xf32>
    %312 = arith.subf %311, %305 : vector<8x32xf32>
    %313 = arith.mulf %312, %310 : vector<8x32xf32>
    %314 = arith.mulf %305, %277 : vector<8x32xf32>
    %315 = arith.addf %313, %314 : vector<8x32xf32>
    %c0_58 = arith.constant 0 : index
    %c0_59 = arith.constant 0 : index
    %316 = vector.load %arg5[%c0_58, %c0_59] : memref<32x128xf32, #tpu.memory_space<vmem>>, vector<32x128xf32>
    %cst_60 = arith.constant dense<0.000000e+00> : vector<8x128xf32>
    %317 = tpu.matmul %315, %316, %cst_60 {dimension_numbers = #tpu.dot_dimension_numbers<[1], [0], [0], [1], [0, 0, 1, 1], [], []>, precision = #tpu.contract_precision<fp32>} : vector<8x32xf32>, vector<32x128xf32>, vector<8x128xf32> -> vector<8x128xf32>
    %c0_61 = arith.constant 0 : index
    %c0_62 = arith.constant 0 : index
    %318 = vector.load %arg6[%c0_61, %c0_62] : memref<1x128xf32, #tpu.memory_space<vmem>>, vector<1x128xf32>
    %319 = vector.broadcast %318 : vector<1x128xf32> to vector<8x128xf32>
    %320 = arith.addf %317, %319 : vector<8x128xf32>
    %cst_63 = arith.constant dense<0xFF800000> : vector<8xf32>
    %321 = vector.multi_reduction <maximumf>, %320, %cst_63 [1] : vector<8x128xf32> to vector<8xf32>
    %322 = vector.shape_cast %321 : vector<8xf32> to vector<8x1xf32>
    %323 = vector.broadcast %322 : vector<8x1xf32> to vector<8x128xf32>
    %324 = arith.subf %320, %323 : vector<8x128xf32>
    %325 = math.exp %324 : vector<8x128xf32>
    %cst_64 = arith.constant dense<0.000000e+00> : vector<8xf32>
    %326 = vector.multi_reduction <add>, %325, %cst_64 [1] : vector<8x128xf32> to vector<8xf32>
    %327 = vector.shape_cast %326 : vector<8xf32> to vector<8x1xf32>
    %328 = vector.broadcast %327 : vector<8x1xf32> to vector<8x128xf32>
    %329 = arith.divf %325, %328 : vector<8x128xf32>
    %c0_65 = arith.constant 0 : index
    %c0_66 = arith.constant 0 : index
    %330 = vector.load %arg7[%c0_65, %c0_66] : memref<8x128xf32, #tpu.memory_space<vmem>>, vector<8x128xf32>
    tpu.vector_store %arg7[%c0_65, %c0_66], %329 {strides = array<i32>} : memref<8x128xf32, #tpu.memory_space<vmem>>, vector<8x128xf32>,
    return
  }
}

</mosaic_0001>

<llo_original>
// kernel: torch_model_forward.1
$region0: #{torch_model_forward.1}
  #allocation0 [shape = 'u32[]', space=smem, size = 0x4, offset = 0x4, fixed_abs, tag = 'smem constant byte address 0x4 - core index']
  #allocation1 [shape = 'u32[72,128]{1,0:T(1,128)}', space=vmem, size = 0x9000, scoped, tag = 'internal scratch']
  %s0 = inlined_call_operand.vmem [shape: s32[64,1], index: 0, kind: input, shape index: {}]
  %s1 = inlined_call_operand.hbm [shape: f32[128,128], index: 1, kind: input, shape index: {}]
  %s2 = inlined_call_operand.vmem [shape: bf16[32,128], index: 2, kind: input, shape index: {}]
  %s3 = inlined_call_operand.vmem [shape: bf16[32,128], index: 3, kind: input, shape index: {}]
  %s4 = inlined_call_operand.vmem [shape: f32[1,128], index: 4, kind: input, shape index: {}]
  %s5 = inlined_call_operand.vmem [shape: f32[32,128], index: 5, kind: input, shape index: {}]
  %s6 = inlined_call_operand.vmem [shape: f32[1,128], index: 6, kind: input, shape index: {}]
  %s7 = inlined_call_operand.hbm [shape: f32[8,128], index: 7, kind: output, shape index: {}]
  %s8 = sld [smem:[#allocation0]]
  $region42: #{torch_model_forward.1} parent=0
    _
  %s10 = ssub.s32 1, %s8
  %s11 = scalar_select 0, %s10, %s8
  $region1: #{torch_model_forward.1} parent=0
    #allocation2 [shape = 'u8[65536]{0}', space=vmem, size = 0x10000, scoped, tag = 'input window, operand 1, single buffered']
    #allocation3 [shape = 's32[1]{0}', space=sflag, size = 0x4, scoped, tag = 'scoped memory for torch_model_forward.1']
    #allocation4 [shape = 's32[1]{0}', space=sflag, size = 0x4, scoped, tag = 'scoped memory for torch_model_forward.1']
    #allocation5 [shape = 'u8[4096]{0}', space=vmem, size = 0x1000, scoped, tag = 'output window, operand 0, single buffered']
    %12 = vsyncpa [#allocation3], 0
    %13 = vsyncpa [#allocation4], 0
    // Predicated region
    $region2: #{torch_model_forward.1} parent=1 // pred_check
      _
    $region3: #{torch_model_forward.1} parent=1 // pred_check_branch
      %15 = sbr.rel (0) target = $region5
    $region4: #{torch_model_forward.1} parent=1 // pred_region
      _
    $region5: #{torch_model_forward.1} parent=1 // pred_fallthru
      _
    // Predicated region
    $region6: #{torch_model_forward.1} parent=1 // pred_check
      _
    $region7: #{torch_model_forward.1} parent=1 // pred_check_branch
      %17 = sbr.rel (0) target = $region9
    $region8: #{torch_model_forward.1} parent=1 // pred_region
      %19 = vsyncadd [#allocation3], 0
      %s20 = sshll.u32 %s1, 4
      %s21 = int_to_ptr.hbm [resolvable:$true] %s20
      %s22 = sshll.u32 [#allocation2], 4
      %s23 = int_to_ptr.vmem [resolvable:$true] %s22
      %28 = dma.hbm_to_vmem [thread:$0]  %s21, 2048, %s23, [#allocation3], 128, 128, 8
    $region9: #{torch_model_forward.1} parent=1 // pred_fallthru
      _
    // Predicated region
    $region10: #{torch_model_forward.1} parent=1 // pred_check
      _
    $region11: #{torch_model_forward.1} parent=1 // pred_check_branch
      %30 = sbr.rel (0) target = $region13
    $region12: #{torch_model_forward.1} parent=1 // pred_region
      _
    $region13: #{torch_model_forward.1} parent=1 // pred_fallthru
      _
    // Predicated region
    $region14: #{torch_model_forward.1} parent=1 // pred_check
      _
    $region15: #{torch_model_forward.1} parent=1 // pred_check_branch
      %32 = sbr.rel (0) target = $region17
    $region16: #{torch_model_forward.1} parent=1 // pred_region
      _
    $region17: #{torch_model_forward.1} parent=1 // pred_fallthru
      _
    // Predicated region
    $region18: #{torch_model_forward.1} parent=1 // pred_check
      _
    $region19: #{torch_model_forward.1} parent=1 // pred_check_branch
      %34 = sbr.rel (0) target = $region21
    $region20: #{torch_model_forward.1} parent=1 // pred_region
      _
    $region21: #{torch_model_forward.1} parent=1 // pred_fallthru
      _
    // Predicated region
    $region22: #{torch_model_forward.1} parent=1 // pred_check
      _
    $region23: #{torch_model_forward.1} parent=1 // pred_check_branch
      %36 = sbr.rel (0) target = $region25
    $region24: #{torch_model_forward.1} parent=1 // pred_region
      _
    $region25: #{torch_model_forward.1} parent=1 // pred_fallthru
      _
    // Predicated region
    $region26: #{torch_model_forward.1} parent=1 // pred_check
      _
    $region27: #{torch_model_forward.1} parent=1 // pred_check_branch
      %38 = sbr.rel (0) target = $region29
    $region28: #{torch_model_forward.1} parent=1 // pred_region
      _
    $region29: #{torch_model_forward.1} parent=1 // pred_fallthru
      _
    // Predicated region
    $region30: #{torch_model_forward.1} parent=1 // pred_check
      _
    $region31: #{torch_model_forward.1} parent=1 // pred_check_branch
      %40 = sbr.rel (0) target = $region33
    $region32: #{torch_model_forward.1} parent=1 // pred_region
      %42 = dma.done [#allocation3], 2048
    $region33: #{torch_model_forward.1} parent=1 // pred_fallthru
      _
    %v44 = vld [vmem:[%s0] sm:$0xff]
    %v45 = vld [vmem:[%s0 + $0x8] sm:$0xff]
    %v46 = vld [vmem:[%s0 + $0x10] sm:$0xff]
    %v47 = vld [vmem:[%s0 + $0x18] sm:$0xff]
    %v48 = vld [vmem:[%s0 + $0x20] sm:$0xff]
    %v49 = vld [vmem:[%s0 + $0x28] sm:$0xff]
    %v50 = vld [vmem:[%s0 + $0x30] sm:$0xff]
    %v51 = vld [vmem:[%s0 + $0x38] sm:$0xff]
    %v52 = vlaneseq
    %v53 = vand.u32 %v52, 127
    %54 = vset.pattern.permute.xlu0 0
    %55 = vperm.xlu0 %54, %v44
    %v56 = vpop.permute.xlu0 %55
    %57 = vset.pattern.permute.xlu0 0
    %58 = vperm.xlu0 %57, %v45
    %v59 = vpop.permute.xlu0 %58
    %60 = vset.pattern.permute.xlu0 0
    %61 = vperm.xlu0 %60, %v46
    %v62 = vpop.permute.xlu0 %61
    %63 = vset.pattern.permute.xlu0 0
    %64 = vperm.xlu0 %63, %v47
    %v65 = vpop.permute.xlu0 %64
    %66 = vset.pattern.permute.xlu0 0
    %67 = vperm.xlu0 %66, %v48
    %v68 = vpop.permute.xlu0 %67
    %69 = vset.pattern.permute.xlu0 0
    %70 = vperm.xlu0 %69, %v49
    %v71 = vpop.permute.xlu0 %70
    %72 = vset.pattern.permute.xlu0 0
    %73 = vperm.xlu0 %72, %v50
    %v74 = vpop.permute.xlu0 %73
    %75 = vset.pattern.permute.xlu0 0
    %76 = vperm.xlu0 %75, %v51
    %v77 = vpop.permute.xlu0 %76
    %vm78 = vcmp.eq.s32.totalorder %v53, %v56
    %vm79 = vcmp.eq.s32.totalorder %v53, %v59
    %vm80 = vcmp.eq.s32.totalorder %v53, %v62
    %vm81 = vcmp.eq.s32.totalorder %v53, %v65
    %vm82 = vcmp.eq.s32.totalorder %v53, %v68
    %vm83 = vcmp.eq.s32.totalorder %v53, %v71
    %vm84 = vcmp.eq.s32.totalorder %v53, %v74
    %vm85 = vcmp.eq.s32.totalorder %v53, %v77
    %v86 = vsel %vm78, 1, 0
    %v87 = vsel %vm79, 1, 0
    %v88 = vsel %vm80, 1, 0
    %v89 = vsel %vm81, 1, 0
    %v90 = vsel %vm82, 1, 0
    %v91 = vsel %vm83, 1, 0
    %v92 = vsel %vm84, 1, 0
    %v93 = vsel %vm85, 1, 0
    %v94 = vcvt.s32.f32 %v86
    %v95 = vcvt.s32.f32 %v87
    %v96 = vcvt.s32.f32 %v88
    %v97 = vcvt.s32.f32 %v89
    %v98 = vcvt.s32.f32 %v90
    %v99 = vcvt.s32.f32 %v91
    %v100 = vcvt.s32.f32 %v92
    %v101 = vcvt.s32.f32 %v93
    %v102 = vld [vmem:[#allocation2] sm:$0xff]
    %v103 = vld [vmem:[#allocation2 + $0x8] sm:$0xff]
    %v104 = vld [vmem:[#allocation2 + $0x10] sm:$0xff]
    %v105 = vld [vmem:[#allocation2 + $0x18] sm:$0xff]
    %v106 = vld [vmem:[#allocation2 + $0x20] sm:$0xff]
    %v107 = vld [vmem:[#allocation2 + $0x28] sm:$0xff]
    %v108 = vld [vmem:[#allocation2 + $0x30] sm:$0xff]
    %v109 = vld [vmem:[#allocation2 + $0x38] sm:$0xff]
    %v110 = vld [vmem:[#allocation2 + $0x40] sm:$0xff]
    %v111 = vld [vmem:[#allocation2 + $0x48] sm:$0xff]
    %v112 = vld [vmem:[#allocation2 + $0x50] sm:$0xff]
    %v113 = vld [vmem:[#allocation2 + $0x58] sm:$0xff]
    %v114 = vld [vmem:[#allocation2 + $0x60] sm:$0xff]
    %v115 = vld [vmem:[#allocation2 + $0x68] sm:$0xff]
    %v116 = vld [vmem:[#allocation2 + $0x70] sm:$0xff]
    %v117 = vld [vmem:[#allocation2 + $0x78] sm:$0xff]
    %v118 = vand.u32 %v117, 4294901760
    %119 = vmatpush.msra.mxu0 %v118
    %v120 = vand.u32 %v116, 4294901760
    %121 = vmatpush.msra.mxu0 %v120
    %v122 = vand.u32 %v115, 4294901760
    %123 = vmatpush.msra.mxu0 %v122
    %v124 = vand.u32 %v114, 4294901760
    %125 = vmatpush.msra.mxu0 %v124
    %v126 = vand.u32 %v113, 4294901760
    %127 = vmatpush.msra.mxu0 %v126
    %v128 = vand.u32 %v112, 4294901760
    %129 = vmatpush.msra.mxu0 %v128
    %v130 = vand.u32 %v111, 4294901760
    %131 = vmatpush.msra.mxu0 %v130
    %v132 = vand.u32 %v110, 4294901760
    %133 = vmatpush.msra.mxu0 %v132
    %v134 = vand.u32 %v109, 4294901760
    %135 = vmatpush.msra.mxu0 %v134
    %v136 = vand.u32 %v108, 4294901760
    %137 = vmatpush.msra.mxu0 %v136
    %v138 = vand.u32 %v107, 4294901760
    %139 = vmatpush.msra.mxu0 %v138
    %v140 = vand.u32 %v106, 4294901760
    %141 = vmatpush.msra.mxu0 %v140
    %v142 = vand.u32 %v105, 4294901760
    %143 = vmatpush.msra.mxu0 %v142
    %v144 = vand.u32 %v104, 4294901760
    %145 = vmatpush.msra.mxu0 %v144
    %v146 = vand.u32 %v103, 4294901760
    %147 = vmatpush.msra.mxu0 %v146
    %v148 = vand.u32 %v102, 4294901760
    %149 = vmatpush.msra.mxu0 %v148
    %v150 = vand.u32 %v94, 4294901760
    %v151 = vsub.f32 %v94, %v150
    %v152 = vand.u32 %v151, 4294901760
    %v153 = vsub.f32 %v151, %v152
    %v154 = vand.u32 %v153, 4294901760
    %155 = vmatmul.f32.gmra.mxu0 %v154
    %v156 = vpop.f32.mrf.mxu0
    %v157 = vadd.f32 0.0, %v156
    %v158 = vand.u32 %v95, 4294901760
    %v159 = vsub.f32 %v95, %v158
    %v160 = vand.u32 %v159, 4294901760
    %v161 = vsub.f32 %v159, %v160
    %v162 = vand.u32 %v161, 4294901760
    %163 = vmatmul.f32.gmra.mxu0 %v162
    %v164 = vpop.f32.mrf.mxu0
    %v165 = vadd.f32 0.0, %v164
    %v166 = vand.u32 %v96, 4294901760
    %v167 = vsub.f32 %v96, %v166
    %v168 = vand.u32 %v167, 4294901760
    %v169 = vsub.f32 %v167, %v168
    %v170 = vand.u32 %v169, 4294901760
    %171 = vmatmul.f32.gmra.mxu0 %v170
    %v172 = vpop.f32.mrf.mxu0
    %v173 = vadd.f32 0.0, %v172
    %v174 = vand.u32 %v97, 4294901760
    %v175 = vsub.f32 %v97, %v174
    %v176 = vand.u32 %v175, 4294901760
    %v177 = vsub.f32 %v175, %v176
    %v178 = vand.u32 %v177, 4294901760
    %179 = vmatmul.f32.gmra.mxu0 %v178
    %v180 = vpop.f32.mrf.mxu0
    %v181 = vadd.f32 0.0, %v180
    %v182 = vand.u32 %v98, 4294901760
    %v183 = vsub.f32 %v98, %v182
    %v184 = vand.u32 %v183, 4294901760
    %v185 = vsub.f32 %v183, %v184
    %v186 = vand.u32 %v185, 4294901760
    %187 = vmatmul.f32.gmra.mxu0 %v186
    %v188 = vpop.f32.mrf.mxu0
    %v189 = vadd.f32 0.0, %v188
    %v190 = vand.u32 %v99, 4294901760
    %v191 = vsub.f32 %v99, %v190
    %v192 = vand.u32 %v191, 4294901760
    %v193 = vsub.f32 %v191, %v192
    %v194 = vand.u32 %v193, 4294901760
    %195 = vmatmul.f32.gmra.mxu0 %v194
    %v196 = vpop.f32.mrf.mxu0
    %v197 = vadd.f32 0.0, %v196
    %v198 = vand.u32 %v100, 4294901760
    %v199 = vsub.f32 %v100, %v198
    %v200 = vand.u32 %v199, 4294901760
    %v201 = vsub.f32 %v199, %v200
    %v202 = vand.u32 %v201, 4294901760
    %203 = vmatmul.f32.gmra.mxu0 %v202
    %v204 = vpop.f32.mrf.mxu0
    %v205 = vadd.f32 0.0, %v204
    %v206 = vand.u32 %v101, 4294901760
    %v207 = vsub.f32 %v101, %v206
    %v208 = vand.u32 %v207, 4294901760
    %v209 = vsub.f32 %v207, %v208
    %v210 = vand.u32 %v209, 4294901760
    %211 = vmatmul.f32.gmra.mxu0 %v210
    %v212 = vpop.f32.mrf.mxu0
    %v213 = vadd.f32 0.0, %v212
    %214 = vdwg.mxu0
    %v215 = vand.u32 %v117, 4294901760
    %v216 = vsub.f32 %v117, %v215
    %v217 = vand.u32 %v216, 4294901760
    %v218 = vsub.f32 %v216, %v217
    %v219 = vand.u32 %v218, 4294901760
    %220 = vmatpush.msra.mxu0 %v219
    %v221 = vand.u32 %v116, 4294901760
    %v222 = vsub.f32 %v116, %v221
    %v223 = vand.u32 %v222, 4294901760
    %v224 = vsub.f32 %v222, %v223
    %v225 = vand.u32 %v224, 4294901760
    %226 = vmatpush.msra.mxu0 %v225
    %v227 = vand.u32 %v115, 4294901760
    %v228 = vsub.f32 %v115, %v227
    %v229 = vand.u32 %v228, 4294901760
    %v230 = vsub.f32 %v228, %v229
    %v231 = vand.u32 %v230, 4294901760
    %232 = vmatpush.msra.mxu0 %v231
    %v233 = vand.u32 %v114, 4294901760
    %v234 = vsub.f32 %v114, %v233
    %v235 = vand.u32 %v234, 4294901760
    %v236 = vsub.f32 %v234, %v235
    %v237 = vand.u32 %v236, 4294901760
    %238 = vmatpush.msra.mxu0 %v237
    %v239 = vand.u32 %v113, 4294901760
    %v240 = vsub.f32 %v113, %v239
    %v241 = vand.u32 %v240, 4294901760
    %v242 = vsub.f32 %v240, %v241
    %v243 = vand.u32 %v242, 4294901760
    %244 = vmatpush.msra.mxu0 %v243
    %v245 = vand.u32 %v112, 4294901760
    %v246 = vsub.f32 %v112, %v245
    %v247 = vand.u32 %v246, 4294901760
    %v248 = vsub.f32 %v246, %v247
    %v249 = vand.u32 %v248, 4294901760
    %250 = vmatpush.msra.mxu0 %v249
    %v251 = vand.u32 %v111, 4294901760
    %v252 = vsub.f32 %v111, %v251
    %v253 = vand.u32 %v252, 4294901760
    %v254 = vsub.f32 %v252, %v253
    %v255 = vand.u32 %v254, 4294901760
    %256 = vmatpush.msra.mxu0 %v255
    %v257 = vand.u32 %v110, 4294901760
    %v258 = vsub.f32 %v110, %v257
    %v259 = vand.u32 %v258, 4294901760
    %v260 = vsub.f32 %v258, %v259
    %v261 = vand.u32 %v260, 4294901760
    %262 = vmatpush.msra.mxu0 %v261
    %v263 = vand.u32 %v109, 4294901760
    %v264 = vsub.f32 %v109, %v263
    %v265 = vand.u32 %v264, 4294901760
    %v266 = vsub.f32 %v264, %v265
    %v267 = vand.u32 %v266, 4294901760
    %268 = vmatpush.msra.mxu0 %v267
    %v269 = vand.u32 %v108, 4294901760
    %v270 = vsub.f32 %v108, %v269
    %v271 = vand.u32 %v270, 4294901760
    %v272 = vsub.f32 %v270, %v271
    %v273 = vand.u32 %v272, 4294901760
    %274 = vmatpush.msra.mxu0 %v273
    %v275 = vand.u32 %v107, 4294901760
    %v276 = vsub.f32 %v107, %v275
    %v277 = vand.u32 %v276, 4294901760
    %v278 = vsub.f32 %v276, %v277
    %v279 = vand.u32 %v278, 4294901760
    %280 = vmatpush.msra.mxu0 %v279
    %v281 = vand.u32 %v106, 4294901760
    %v282 = vsub.f32 %v106, %v281
    %v283 = vand.u32 %v282, 4294901760
    %v284 = vsub.f32 %v282, %v283
    %v285 = vand.u32 %v284, 4294901760
    %286 = vmatpush.msra.mxu0 %v285
    %v287 = vand.u32 %v105, 4294901760
    %v288 = vsub.f32 %v105, %v287
    %v289 = vand.u32 %v288, 4294901760
    %v290 = vsub.f32 %v288, %v289
    %v291 = vand.u32 %v290, 4294901760
    %292 = vmatpush.msra.mxu0 %v291
    %v293 = vand.u32 %v104, 4294901760
    %v294 = vsub.f32 %v104, %v293
    %v295 = vand.u32 %v294, 4294901760
    %v296 = vsub.f32 %v294, %v295
    %v297 = vand.u32 %v296, 4294901760
    %298 = vmatpush.msra.mxu0 %v297
    %v299 = vand.u32 %v103, 4294901760
    %v300 = vsub.f32 %v103, %v299
    %v301 = vand.u32 %v300, 4294901760
    %v302 = vsub.f32 %v300, %v301
    %v303 = vand.u32 %v302, 4294901760
    %304 = vmatpush.msra.mxu0 %v303
    %v305 = vand.u32 %v102, 4294901760
    %v306 = vsub.f32 %v102, %v305
    %v307 = vand.u32 %v306, 4294901760
    %v308 = vsub.f32 %v306, %v307
    %v309 = vand.u32 %v308, 4294901760
    %310 = vmatpush.msra.mxu0 %v309
    %v311 = vand.u32 %v94, 4294901760
    %312 = vmatmul.f32.gmra.mxu0 %v311
    %v313 = vpop.f32.mrf.mxu0
    %v314 = vadd.f32 %v157, %v313
    %v315 = vand.u32 %v95, 4294901760
    %316 = vmatmul.f32.gmra.mxu0 %v315
    %v317 = vpop.f32.mrf.mxu0
    %v318 = vadd.f32 %v165, %v317
    %v319 = vand.u32 %v96, 4294901760
    %320 = vmatmul.f32.gmra.mxu0 %v319
    %v321 = vpop.f32.mrf.mxu0
    %v322 = vadd.f32 %v173, %v321
    %v323 = vand.u32 %v97, 4294901760
    %324 = vmatmul.f32.gmra.mxu0 %v323
    %v325 = vpop.f32.mrf.mxu0
    %v326 = vadd.f32 %v181, %v325
    %v327 = vand.u32 %v98, 4294901760
    %328 = vmatmul.f32.gmra.mxu0 %v327
    %v329 = vpop.f32.mrf.mxu0
    %v330 = vadd.f32 %v189, %v329
    %v331 = vand.u32 %v99, 4294901760
    %332 = vmatmul.f32.gmra.mxu0 %v331
    %v333 = vpop.f32.mrf.mxu0
    %v334 = vadd.f32 %v197, %v333
    %v335 = vand.u32 %v100, 4294901760
    %336 = vmatmul.f32.gmra.mxu0 %v335
    %v337 = vpop.f32.mrf.mxu0
    %v338 = vadd.f32 %v205, %v337
    %v339 = vand.u32 %v101, 4294901760
    %340 = vmatmul.f32.gmra.mxu0 %v339
    %v341 = vpop.f32.mrf.mxu0
    %v342 = vadd.f32 %v213, %v341
    %343 = vdwg.mxu0
    %v344 = vand.u32 %v117, 4294901760
    %v345 = vsub.f32 %v117, %v344
    %346 = vmatpush.msra.mxu0 %v345
    %v347 = vand.u32 %v116, 4294901760
    %v348 = vsub.f32 %v116, %v347
    %349 = vmatpush.msra.mxu0 %v348
    %v350 = vand.u32 %v115, 4294901760
    %v351 = vsub.f32 %v115, %v350
    %352 = vmatpush.msra.mxu0 %v351
    %v353 = vand.u32 %v114, 4294901760
    %v354 = vsub.f32 %v114, %v353
    %355 = vmatpush.msra.mxu0 %v354
    %v356 = vand.u32 %v113, 4294901760
    %v357 = vsub.f32 %v113, %v356
    %358 = vmatpush.msra.mxu0 %v357
    %v359 = vand.u32 %v112, 4294901760
    %v360 = vsub.f32 %v112, %v359
    %361 = vmatpush.msra.mxu0 %v360
    %v362 = vand.u32 %v111, 4294901760
    %v363 = vsub.f32 %v111, %v362
    %364 = vmatpush.msra.mxu0 %v363
    %v365 = vand.u32 %v110, 4294901760
    %v366 = vsub.f32 %v110, %v365
    %367 = vmatpush.msra.mxu0 %v366
    %v368 = vand.u32 %v109, 4294901760
    %v369 = vsub.f32 %v109, %v368
    %370 = vmatpush.msra.mxu0 %v369
    %v371 = vand.u32 %v108, 4294901760
    %v372 = vsub.f32 %v108, %v371
    %373 = vmatpush.msra.mxu0 %v372
    %v374 = vand.u32 %v107, 4294901760
    %v375 = vsub.f32 %v107, %v374
    %376 = vmatpush.msra.mxu0 %v375
    %v377 = vand.u32 %v106, 4294901760
    %v378 = vsub.f32 %v106, %v377
    %379 = vmatpush.msra.mxu0 %v378
    %v380 = vand.u32 %v105, 4294901760
    %v381 = vsub.f32 %v105, %v380
    %382 = vmatpush.msra.mxu0 %v381
    %v383 = vand.u32 %v104, 4294901760
    %v384 = vsub.f32 %v104, %v383
    %385 = vmatpush.msra.mxu0 %v384
    %v386 = vand.u32 %v103, 4294901760
    %v387 = vsub.f32 %v103, %v386
    %388 = vmatpush.msra.mxu0 %v387
    %v389 = vand.u32 %v102, 4294901760
    %v390 = vsub.f32 %v102, %v389
    %391 = vmatpush.msra.mxu0 %v390
    %v392 = vand.u32 %v94, 4294901760
    %v393 = vsub.f32 %v94, %v392
    %394 = vmatmul.f32.gmra.mxu0 %v393
    %v395 = vpop.f32.mrf.mxu0
    %v396 = vadd.f32 %v314, %v395
    %v397 = vand.u32 %v95, 4294901760
    %v398 = vsub.f32 %v95, %v397
    %399 = vmatmul.f32.gmra.mxu0 %v398
    %v400 = vpop.f32.mrf.mxu0
    %v401 = vadd.f32 %v318, %v400
    %v402 = vand.u32 %v96, 4294901760
    %v403 = vsub.f32 %v96, %v402
    %404 = vmatmul.f32.gmra.mxu0 %v403
    %v405 = vpop.f32.mrf.mxu0
    %v406 = vadd.f32 %v322, %v405
    %v407 = vand.u32 %v97, 4294901760
    %v408 = vsub.f32 %v97, %v407
    %409 = vmatmul.f32.gmra.mxu0 %v408
    %v410 = vpop.f32.mrf.mxu0
    %v411 = vadd.f32 %v326, %v410
    %v412 = vand.u32 %v98, 4294901760
    %v413 = vsub.f32 %v98, %v412
    %414 = vmatmul.f32.gmra.mxu0 %v413
    %v415 = vpop.f32.mrf.mxu0
    %v416 = vadd.f32 %v330, %v415
    %v417 = vand.u32 %v99, 4294901760
    %v418 = vsub.f32 %v99, %v417
    %419 = vmatmul.f32.gmra.mxu0 %v418
    %v420 = vpop.f32.mrf.mxu0
    %v421 = vadd.f32 %v334, %v420
    %v422 = vand.u32 %v100, 4294901760
    %v423 = vsub.f32 %v100, %v422
    %424 = vmatmul.f32.gmra.mxu0 %v423
    %v425 = vpop.f32.mrf.mxu0
    %v426 = vadd.f32 %v338, %v425
    %v427 = vand.u32 %v101, 4294901760
    %v428 = vsub.f32 %v101, %v427
    %429 = vmatmul.f32.gmra.mxu0 %v428
    %v430 = vpop.f32.mrf.mxu0
    %v431 = vadd.f32 %v342, %v430
    %432 = vdwg.mxu0
    %v433 = vand.u32 %v117, 4294901760
    %434 = vmatpush.msra.mxu0 %v433
    %v435 = vand.u32 %v116, 4294901760
    %436 = vmatpush.msra.mxu0 %v435
    %v437 = vand.u32 %v115, 4294901760
    %438 = vmatpush.msra.mxu0 %v437
    %v439 = vand.u32 %v114, 4294901760
    %440 = vmatpush.msra.mxu0 %v439
    %v441 = vand.u32 %v113, 4294901760
    %442 = vmatpush.msra.mxu0 %v441
    %v443 = vand.u32 %v112, 4294901760
    %444 = vmatpush.msra.mxu0 %v443
    %v445 = vand.u32 %v111, 4294901760
    %446 = vmatpush.msra.mxu0 %v445
    %v447 = vand.u32 %v110, 4294901760
    %448 = vmatpush.msra.mxu0 %v447
    %v449 = vand.u32 %v109, 4294901760
    %450 = vmatpush.msra.mxu0 %v449
    %v451 = vand.u32 %v108, 4294901760
    %452 = vmatpush.msra.mxu0 %v451
    %v453 = vand.u32 %v107, 4294901760
    %454 = vmatpush.msra.mxu0 %v453
    %v455 = vand.u32 %v106, 4294901760
    %456 = vmatpush.msra.mxu0 %v455
    %v457 = vand.u32 %v105, 4294901760
    %458 = vmatpush.msra.mxu0 %v457
    %v459 = vand.u32 %v104, 4294901760
    %460 = vmatpush.msra.mxu0 %v459
    %v461 = vand.u32 %v103, 4294901760
    %462 = vmatpush.msra.mxu0 %v461
    %v463 = vand.u32 %v102, 4294901760
    %464 = vmatpush.msra.mxu0 %v463
    %v465 = vand.u32 %v94, 4294901760
    %v466 = vsub.f32 %v94, %v465
    %v467 = vand.u32 %v466, 4294901760
    %468 = vmatmul.f32.gmra.mxu0 %v467
    %v469 = vpop.f32.mrf.mxu0
    %v470 = vadd.f32 %v396, %v469
    %v471 = vand.u32 %v95, 4294901760
    %v472 = vsub.f32 %v95, %v471
    %v473 = vand.u32 %v472, 4294901760
    %474 = vmatmul.f32.gmra.mxu0 %v473
    %v475 = vpop.f32.mrf.mxu0
    %v476 = vadd.f32 %v401, %v475
    %v477 = vand.u32 %v96, 4294901760
    %v478 = vsub.f32 %v96, %v477
    %v479 = vand.u32 %v478, 4294901760
    %480 = vmatmul.f32.gmra.mxu0 %v479
    %v481 = vpop.f32.mrf.mxu0
    %v482 = vadd.f32 %v406, %v481
    %v483 = vand.u32 %v97, 4294901760
    %v484 = vsub.f32 %v97, %v483
    %v485 = vand.u32 %v484, 4294901760
    %486 = vmatmul.f32.gmra.mxu0 %v485
    %v487 = vpop.f32.mrf.mxu0
    %v488 = vadd.f32 %v411, %v487
    %v489 = vand.u32 %v98, 4294901760
    %v490 = vsub.f32 %v98, %v489
    %v491 = vand.u32 %v490, 4294901760
    %492 = vmatmul.f32.gmra.mxu0 %v491
    %v493 = vpop.f32.mrf.mxu0
    %v494 = vadd.f32 %v416, %v493
    %v495 = vand.u32 %v99, 4294901760
    %v496 = vsub.f32 %v99, %v495
    %v497 = vand.u32 %v496, 4294901760
    %498 = vmatmul.f32.gmra.mxu0 %v497
    %v499 = vpop.f32.mrf.mxu0
    %v500 = vadd.f32 %v421, %v499
    %v501 = vand.u32 %v100, 4294901760
    %v502 = vsub.f32 %v100, %v501
    %v503 = vand.u32 %v502, 4294901760
    %504 = vmatmul.f32.gmra.mxu0 %v503
    %v505 = vpop.f32.mrf.mxu0
    %v506 = vadd.f32 %v426, %v505
    %v507 = vand.u32 %v101, 4294901760
    %v508 = vsub.f32 %v101, %v507
    %v509 = vand.u32 %v508, 4294901760
    %510 = vmatmul.f32.gmra.mxu0 %v509
    %v511 = vpop.f32.mrf.mxu0
    %v512 = vadd.f32 %v431, %v511
    %513 = vdwg.mxu0
    %v514 = vand.u32 %v117, 4294901760
    %v515 = vsub.f32 %v117, %v514
    %v516 = vand.u32 %v515, 4294901760
    %517 = vmatpush.msra.mxu0 %v516
    %v518 = vand.u32 %v116, 4294901760
    %v519 = vsub.f32 %v116, %v518
    %v520 = vand.u32 %v519, 4294901760
    %521 = vmatpush.msra.mxu0 %v520
    %v522 = vand.u32 %v115, 4294901760
    %v523 = vsub.f32 %v115, %v522
    %v524 = vand.u32 %v523, 4294901760
    %525 = vmatpush.msra.mxu0 %v524
    %v526 = vand.u32 %v114, 4294901760
    %v527 = vsub.f32 %v114, %v526
    %v528 = vand.u32 %v527, 4294901760
    %529 = vmatpush.msra.mxu0 %v528
    %v530 = vand.u32 %v113, 4294901760
    %v531 = vsub.f32 %v113, %v530
    %v532 = vand.u32 %v531, 4294901760
    %533 = vmatpush.msra.mxu0 %v532
    %v534 = vand.u32 %v112, 4294901760
    %v535 = vsub.f32 %v112, %v534
    %v536 = vand.u32 %v535, 4294901760
    %537 = vmatpush.msra.mxu0 %v536
    %v538 = vand.u32 %v111, 4294901760
    %v539 = vsub.f32 %v111, %v538
    %v540 = vand.u32 %v539, 4294901760
    %541 = vmatpush.msra.mxu0 %v540
    %v542 = vand.u32 %v110, 4294901760
    %v543 = vsub.f32 %v110, %v542
    %v544 = vand.u32 %v543, 4294901760
    %545 = vmatpush.msra.mxu0 %v544
    %v546 = vand.u32 %v109, 4294901760
    %v547 = vsub.f32 %v109, %v546
    %v548 = vand.u32 %v547, 4294901760
    %549 = vmatpush.msra.mxu0 %v548
    %v550 = vand.u32 %v108, 4294901760
    %v551 = vsub.f32 %v108, %v550
    %v552 = vand.u32 %v551, 4294901760
    %553 = vmatpush.msra.mxu0 %v552
    %v554 = vand.u32 %v107, 4294901760
    %v555 = vsub.f32 %v107, %v554
    %v556 = vand.u32 %v555, 4294901760
    %557 = vmatpush.msra.mxu0 %v556
    %v558 = vand.u32 %v106, 4294901760
    %v559 = vsub.f32 %v106, %v558
    %v560 = vand.u32 %v559, 4294901760
    %561 = vmatpush.msra.mxu0 %v560
    %v562 = vand.u32 %v105, 4294901760
    %v563 = vsub.f32 %v105, %v562
    %v564 = vand.u32 %v563, 4294901760
    %565 = vmatpush.msra.mxu0 %v564
    %v566 = vand.u32 %v104, 4294901760
    %v567 = vsub.f32 %v104, %v566
    %v568 = vand.u32 %v567, 4294901760
    %569 = vmatpush.msra.mxu0 %v568
    %v570 = vand.u32 %v103, 4294901760
    %v571 = vsub.f32 %v103, %v570
    %v572 = vand.u32 %v571, 4294901760
    %573 = vmatpush.msra.mxu0 %v572
    %v574 = vand.u32 %v102, 4294901760
    %v575 = vsub.f32 %v102, %v574
    %v576 = vand.u32 %v575, 4294901760
    %577 = vmatpush.msra.mxu0 %v576
    %v578 = vand.u32 %v94, 4294901760
    %579 = vmatmul.f32.gmra.mxu0 %v578
    %v580 = vpop.f32.mrf.mxu0
    %v581 = vadd.f32 %v470, %v580
    %v582 = vand.u32 %v95, 4294901760
    %583 = vmatmul.f32.gmra.mxu0 %v582
    %v584 = vpop.f32.mrf.mxu0
    %v585 = vadd.f32 %v476, %v584
    %v586 = vand.u32 %v96, 4294901760
    %587 = vmatmul.f32.gmra.mxu0 %v586
    %v588 = vpop.f32.mrf.mxu0
    %v589 = vadd.f32 %v482, %v588
    %v590 = vand.u32 %v97, 4294901760
    %591 = vmatmul.f32.gmra.mxu0 %v590
    %v592 = vpop.f32.mrf.mxu0
    %v593 = vadd.f32 %v488, %v592
    %v594 = vand.u32 %v98, 4294901760
    %595 = vmatmul.f32.gmra.mxu0 %v594
    %v596 = vpop.f32.mrf.mxu0
    %v597 = vadd.f32 %v494, %v596
    %v598 = vand.u32 %v99, 4294901760
    %599 = vmatmul.f32.gmra.mxu0 %v598
    %v600 = vpop.f32.mrf.mxu0
    %v601 = vadd.f32 %v500, %v600
    %v602 = vand.u32 %v100, 4294901760
    %603 = vmatmul.f32.gmra.mxu0 %v602
    %v604 = vpop.f32.mrf.mxu0
    %v605 = vadd.f32 %v506, %v604
    %v606 = vand.u32 %v101, 4294901760
    %607 = vmatmul.f32.gmra.mxu0 %v606
    %v608 = vpop.f32.mrf.mxu0
    %v609 = vadd.f32 %v512, %v608
    %610 = vdwg.mxu0
    %v611 = vand.u32 %v117, 4294901760
    %612 = vmatpush.msra.mxu0 %v611
    %v613 = vand.u32 %v116, 4294901760
    %614 = vmatpush.msra.mxu0 %v613
    %v615 = vand.u32 %v115, 4294901760
    %616 = vmatpush.msra.mxu0 %v615
    %v617 = vand.u32 %v114, 4294901760
    %618 = vmatpush.msra.mxu0 %v617
    %v619 = vand.u32 %v113, 4294901760
    %620 = vmatpush.msra.mxu0 %v619
    %v621 = vand.u32 %v112, 4294901760
    %622 = vmatpush.msra.mxu0 %v621
    %v623 = vand.u32 %v111, 4294901760
    %624 = vmatpush.msra.mxu0 %v623
    %v625 = vand.u32 %v110, 4294901760
    %626 = vmatpush.msra.mxu0 %v625
    %v627 = vand.u32 %v109, 4294901760
    %628 = vmatpush.msra.mxu0 %v627
    %v629 = vand.u32 %v108, 4294901760
    %630 = vmatpush.msra.mxu0 %v629
    %v631 = vand.u32 %v107, 4294901760
    %632 = vmatpush.msra.mxu0 %v631
    %v633 = vand.u32 %v106, 4294901760
    %634 = vmatpush.msra.mxu0 %v633
    %v635 = vand.u32 %v105, 4294901760
    %636 = vmatpush.msra.mxu0 %v635
    %v637 = vand.u32 %v104, 4294901760
    %638 = vmatpush.msra.mxu0 %v637
    %v639 = vand.u32 %v103, 4294901760
    %640 = vmatpush.msra.mxu0 %v639
    %v641 = vand.u32 %v102, 4294901760
    %642 = vmatpush.msra.mxu0 %v641
    %v643 = vand.u32 %v94, 4294901760
    %644 = vmatmul.f32.gmra.mxu0 %v643
    %v645 = vpop.f32.mrf.mxu0
    %v646 = vadd.f32 %v581, %v645
    %v647 = vand.u32 %v95, 4294901760
    %648 = vmatmul.f32.gmra.mxu0 %v647
    %v649 = vpop.f32.mrf.mxu0
    %v650 = vadd.f32 %v585, %v649
    %v651 = vand.u32 %v96, 4294901760
    %652 = vmatmul.f32.gmra.mxu0 %v651
    %v653 = vpop.f32.mrf.mxu0
    %v654 = vadd.f32 %v589, %v653
    %v655 = vand.u32 %v97, 4294901760
    %656 = vmatmul.f32.gmra.mxu0 %v655
    %v657 = vpop.f32.mrf.mxu0
    %v658 = vadd.f32 %v593, %v657
    %v659 = vand.u32 %v98, 4294901760
    %660 = vmatmul.f32.gmra.mxu0 %v659
    %v661 = vpop.f32.mrf.mxu0
    %v662 = vadd.f32 %v597, %v661
    %v663 = vand.u32 %v99, 4294901760
    %664 = vmatmul.f32.gmra.mxu0 %v663
    %v665 = vpop.f32.mrf.mxu0
    %v666 = vadd.f32 %v601, %v665
    %v667 = vand.u32 %v100, 4294901760
    %668 = vmatmul.f32.gmra.mxu0 %v667
    %v669 = vpop.f32.mrf.mxu0
    %v670 = vadd.f32 %v605, %v669
    %v671 = vand.u32 %v101, 4294901760
    %672 = vmatmul.f32.gmra.mxu0 %v671
    %v673 = vpop.f32.mrf.mxu0
    %v674 = vadd.f32 %v609, %v673
    %675 = vdwg.mxu0
    %v676 = vld [vmem:[%s2] sm:$0xf]
    %v677 = vld [vmem:[%s2 + $0x4] sm:$0xf]
    %v678 = vld [vmem:[%s2 + $0x8] sm:$0xf]
    %v679 = vld [vmem:[%s2 + $0xc] sm:$0xf]
    %v680 = vld [vmem:[%s3] sm:$0xf]
    %v681 = vld [vmem:[%s3 + $0x4] sm:$0xf]
    %v682 = vld [vmem:[%s3 + $0x8] sm:$0xf]
    %v683 = vld [vmem:[%s3 + $0xc] sm:$0xf]
    %v684 = vld [vmem:[%s4] sm:$0x1]
    %v689 = vunpack.c.l.b16 %v680
    %v690 = vunpack.c.l.b16 %v681
    %v691 = vunpack.c.l.b16 %v682
    %v692 = vunpack.c.l.b16 %v683
    %v693 = vpack.c.b16 %v690, %v689
    %v694 = vpack.c.b16 %v692, %v691
    %vm697 = vcmask 261120
    %v699 = vsel %vm697, 0, 0
    %701 = vmatpush.bf16.msra.mxu0 0
    %702 = vmatpush.bf16.msra.mxu0 0
    %703 = vmatpush.bf16.msra.mxu0 0
    %704 = vmatpush.bf16.msra.mxu0 0
    %705 = vmatpush.bf16.msra.mxu0 0
    %706 = vmatpush.bf16.msra.mxu0 0
    %707 = vmatpush.bf16.msra.mxu0 %v694
    %708 = vmatpush.bf16.msra.mxu0 %v693
    %709 = vmatmul.bf16.gmra.mxu0 %v699
    %v710 = vpop.f32.mrf.mxu0
    %v711 = vadd.f32 0.0, %v710
    %v712 = vpop.f32.mrf.mxu0
    %713 = vdwg.mxu0
    %v718 = vunpack.c.l.b16 %v676
    %v719 = vunpack.c.l.b16 %v677
    %v720 = vunpack.c.l.b16 %v678
    %v721 = vunpack.c.l.b16 %v679
    %v722 = vpack.c.b16 %v719, %v718
    %v723 = vpack.c.b16 %v721, %v720
    %726 = vmatpush.bf16.msra.mxu0 0
    %727 = vmatpush.bf16.msra.mxu0 0
    %728 = vmatpush.bf16.msra.mxu0 0
    %729 = vmatpush.bf16.msra.mxu0 0
    %730 = vmatpush.bf16.msra.mxu0 0
    %731 = vmatpush.bf16.msra.mxu0 0
    %732 = vmatpush.bf16.msra.mxu0 %v723
    %733 = vmatpush.bf16.msra.mxu0 %v722
    %734 = vmatmul.bf16.gmra.mxu0 %v699
    %v735 = vpop.f32.mrf.mxu0
    %v736 = vadd.f32 %v711, %v735
    %v737 = vpop.f32.mrf.mxu0
    %738 = vdwg.mxu0
    %739 = vmatpush.bf16.msra.mxu0 0
    %740 = vmatpush.bf16.msra.mxu0 0
    %741 = vmatpush.bf16.msra.mxu0 0
    %742 = vmatpush.bf16.msra.mxu0 0
    %743 = vmatpush.bf16.msra.mxu0 0
    %744 = vmatpush.bf16.msra.mxu0 0
    %745 = vmatpush.bf16.msra.mxu0 %v723
    %746 = vmatpush.bf16.msra.mxu0 %v722
    %747 = vmatmul.bf16.gmra.mxu0 %v699
    %v748 = vpop.f32.mrf.mxu0
    %v749 = vadd.f32 0.0, %v748
    %v750 = vpop.f32.mrf.mxu0
    %751 = vdwg.mxu0
    %v752 = vadd.f32 %v736, %v749
    %v754 = vperm.slane %v684, 0
    %v756 = vadd.f32 %v752, %v754
    %v757 = vadd.f32 %v646, %v756
    %v758 = vxor.u32 %v757, 2147483648
    %v759 = vmul.f32 %v758, 1.442695
    %v760 = vpow.pop %v759
    %v761 = vadd.f32 %v760, 1.0
    %v762 = vrcp.pop %v761
    %v763 = vmul.f32 %v761, %v762
    %v764 = vsub.f32 1.0, %v763
    %v765 = vmul.f32 %v762, %v764
    %v766 = vadd.f32 %v762, %v765
    %vm767 = vweird.f32 %v761
    %vm768 = vweird.f32 %v762
    %vm769 = vmor %vm767, %vm768
    %v770 = vsel %vm769, %v762, %v766
    %v771 = vand.u32 2147483647, %v761
    %vm772 = vcmp.eq.f32.partialorder %v771, 8.507059e+37
    %v773 = vand.u32 %v761, 2147483648
    %v774 = vor.u32 1.1754944e-38, %v773
    %v775 = vsel %vm772, %v774, %v770
    %v776 = vmul.f32 1.0, %v775
    %778 = vrot.lane.b32.xlu0 %v756, 64
    %v779 = vpop.permute.xlu0 %778
    %v781 = vmul.f32 %v776, %v779
    %783 = vrot.lane.b32.xlu0 %v781, 64
    %v784 = vpop.permute.xlu0 %783
    %v786 = vadd.f32 %v646, %v784
    %v787 = vtanh.pop %v786
    %v788 = vsub.f32 1.0, %v776
    %790 = vrot.lane.b32.xlu0 %v787, 96
    %v791 = vpop.permute.xlu0 %790
    %v793 = vmul.f32 %v788, %v791
    %v794 = vmul.f32 %v776, 0.0
    %v795 = vadd.f32 %v793, %v794
    %v796 = vpack.c.bf16 %v795, %v795
    %v797 = vunpack.c.l.bf16 %v796
    %v798 = vsub.f32 %v795, %v797
    %v799 = vpack.c.bf16 %v798, %v798
    %v801 = vunpack.c.l.b16 %v796
    %v802 = vpack.c.b16 %v801, %v801
    %803 = vrot.lane.b32.xlu0 %v802, 96
    %v804 = vpop.permute.xlu0 %803
    %v806 = vsel %vm697, %v804, 0
    %808 = vmatpush.bf16.msra.mxu0 0
    %809 = vmatpush.bf16.msra.mxu0 0
    %810 = vmatpush.bf16.msra.mxu0 0
    %811 = vmatpush.bf16.msra.mxu0 0
    %812 = vmatpush.bf16.msra.mxu0 0
    %813 = vmatpush.bf16.msra.mxu0 0
    %814 = vmatpush.bf16.msra.mxu0 %v694
    %815 = vmatpush.bf16.msra.mxu0 %v693
    %816 = vmatmul.bf16.gmra.mxu0 %v806
    %v817 = vpop.f32.mrf.mxu0
    %v818 = vadd.f32 0.0, %v817
    %v819 = vpop.f32.mrf.mxu0
    %820 = vdwg.mxu0
    %821 = vmatpush.bf16.msra.mxu0 0
    %822 = vmatpush.bf16.msra.mxu0 0
    %823 = vmatpush.bf16.msra.mxu0 0
    %824 = vmatpush.bf16.msra.mxu0 0
    %825 = vmatpush.bf16.msra.mxu0 0
    %826 = vmatpush.bf16.msra.mxu0 0
    %827 = vmatpush.bf16.msra.mxu0 %v723
    %828 = vmatpush.bf16.msra.mxu0 %v722
    %829 = vmatmul.bf16.gmra.mxu0 %v806
    %v830 = vpop.f32.mrf.mxu0
    %v831 = vadd.f32 %v818, %v830
    %v832 = vpop.f32.mrf.mxu0
    %833 = vdwg.mxu0
    %835 = vrot.lane.b32.xlu0 %v799, 96
    %v836 = vpop.permute.xlu0 %835
    %v838 = vsel %vm697, %v836, 0
    %840 = vmatpush.bf16.msra.mxu0 0
    %841 = vmatpush.bf16.msra.mxu0 0
    %842 = vmatpush.bf16.msra.mxu0 0
    %843 = vmatpush.bf16.msra.mxu0 0
    %844 = vmatpush.bf16.msra.mxu0 0
    %845 = vmatpush.bf16.msra.mxu0 0
    %846 = vmatpush.bf16.msra.mxu0 %v723
    %847 = vmatpush.bf16.msra.mxu0 %v722
    %848 = vmatmul.bf16.gmra.mxu0 %v838
    %v849 = vpop.f32.mrf.mxu0
    %v850 = vadd.f32 0.0, %v849
    %v851 = vpop.f32.mrf.mxu0
    %852 = vdwg.mxu0
    %v853 = vadd.f32 %v831, %v850
    %v854 = vadd.f32 %v853, %v754
    %v855 = vadd.f32 %v650, %v854
    %v856 = vxor.u32 %v855, 2147483648
    %v857 = vmul.f32 %v856, 1.442695
    %v858 = vpow.pop %v857
    %v859 = vadd.f32 %v858, 1.0
    %v860 = vrcp.pop %v859
    %v861 = vmul.f32 %v859, %v860
    %v862 = vsub.f32 1.0, %v861
    %v863 = vmul.f32 %v860, %v862
    %v864 = vadd.f32 %v860, %v863
    %vm865 = vweird.f32 %v859
    %vm866 = vweird.f32 %v860
    %vm867 = vmor %vm865, %vm866
    %v868 = vsel %vm867, %v860, %v864
    %v869 = vand.u32 2147483647, %v859
    %vm870 = vcmp.eq.f32.partialorder %v869, 8.507059e+37
    %v871 = vand.u32 %v859, 2147483648
    %v872 = vor.u32 1.1754944e-38, %v871
    %v873 = vsel %vm870, %v872, %v868
    %v874 = vmul.f32 1.0, %v873
    %876 = vrot.lane.b32.xlu0 %v854, 64
    %v877 = vpop.permute.xlu0 %876
    %v879 = vmul.f32 %v874, %v877
    %881 = vrot.lane.b32.xlu0 %v879, 64
    %v882 = vpop.permute.xlu0 %881
    %v884 = vadd.f32 %v650, %v882
    %v885 = vtanh.pop %v884
    %v886 = vsub.f32 1.0, %v874
    %888 = vrot.lane.b32.xlu0 %v885, 96
    %v889 = vpop.permute.xlu0 %888
    %v891 = vmul.f32 %v886, %v889
    %v892 = vmul.f32 %v874, %v795
    %v893 = vadd.f32 %v891, %v892
    %v894 = vpack.c.bf16 %v893, %v893
    %v895 = vunpack.c.l.bf16 %v894
    %v896 = vsub.f32 %v893, %v895
    %v897 = vpack.c.bf16 %v896, %v896
    %v899 = vunpack.c.l.b16 %v894
    %v900 = vpack.c.b16 %v899, %v899
    %901 = vrot.lane.b32.xlu0 %v900, 96
    %v902 = vpop.permute.xlu0 %901
    %v904 = vsel %vm697, %v902, 0
    %906 = vmatpush.bf16.msra.mxu0 0
    %907 = vmatpush.bf16.msra.mxu0 0
    %908 = vmatpush.bf16.msra.mxu0 0
    %909 = vmatpush.bf16.msra.mxu0 0
    %910 = vmatpush.bf16.msra.mxu0 0
    %911 = vmatpush.bf16.msra.mxu0 0
    %912 = vmatpush.bf16.msra.mxu0 %v694
    %913 = vmatpush.bf16.msra.mxu0 %v693
    %914 = vmatmul.bf16.gmra.mxu0 %v904
    %v915 = vpop.f32.mrf.mxu0
    %v916 = vadd.f32 0.0, %v915
    %v917 = vpop.f32.mrf.mxu0
    %918 = vdwg.mxu0
    %919 = vmatpush.bf16.msra.mxu0 0
    %920 = vmatpush.bf16.msra.mxu0 0
    %921 = vmatpush.bf16.msra.mxu0 0
    %922 = vmatpush.bf16.msra.mxu0 0
    %923 = vmatpush.bf16.msra.mxu0 0
    %924 = vmatpush.bf16.msra.mxu0 0
    %925 = vmatpush.bf16.msra.mxu0 %v723
    %926 = vmatpush.bf16.msra.mxu0 %v722
    %927 = vmatmul.bf16.gmra.mxu0 %v904
    %v928 = vpop.f32.mrf.mxu0
    %v929 = vadd.f32 %v916, %v928
    %v930 = vpop.f32.mrf.mxu0
    %931 = vdwg.mxu0
    %933 = vrot.lane.b32.xlu0 %v897, 96
    %v934 = vpop.permute.xlu0 %933
    %v936 = vsel %vm697, %v934, 0
    %938 = vmatpush.bf16.msra.mxu0 0
    %939 = vmatpush.bf16.msra.mxu0 0
    %940 = vmatpush.bf16.msra.mxu0 0
    %941 = vmatpush.bf16.msra.mxu0 0
    %942 = vmatpush.bf16.msra.mxu0 0
    %943 = vmatpush.bf16.msra.mxu0 0
    %944 = vmatpush.bf16.msra.mxu0 %v723
    %945 = vmatpush.bf16.msra.mxu0 %v722
    %946 = vmatmul.bf16.gmra.mxu0 %v936
    %v947 = vpop.f32.mrf.mxu0
    %v948 = vadd.f32 0.0, %v947
    %v949 = vpop.f32.mrf.mxu0
    %950 = vdwg.mxu0
    %v951 = vadd.f32 %v929, %v948
    %v952 = vadd.f32 %v951, %v754
    %v953 = vadd.f32 %v654, %v952
    %v954 = vxor.u32 %v953, 2147483648
    %v955 = vmul.f32 %v954, 1.442695
    %v956 = vpow.pop %v955
    %v957 = vadd.f32 %v956, 1.0
    %v958 = vrcp.pop %v957
    %v959 = vmul.f32 %v957, %v958
    %v960 = vsub.f32 1.0, %v959
    %v961 = vmul.f32 %v958, %v960
    %v962 = vadd.f32 %v958, %v961
    %vm963 = vweird.f32 %v957
    %vm964 = vweird.f32 %v958
    %vm965 = vmor %vm963, %vm964
    %v966 = vsel %vm965, %v958, %v962
    %v967 = vand.u32 2147483647, %v957
    %vm968 = vcmp.eq.f32.partialorder %v967, 8.507059e+37
    %v969 = vand.u32 %v957, 2147483648
    %v970 = vor.u32 1.1754944e-38, %v969
    %v971 = vsel %vm968, %v970, %v966
    %v972 = vmul.f32 1.0, %v971
    %974 = vrot.lane.b32.xlu0 %v952, 64
    %v975 = vpop.permute.xlu0 %974
    %v977 = vmul.f32 %v972, %v975
    %979 = vrot.lane.b32.xlu0 %v977, 64
    %v980 = vpop.permute.xlu0 %979
    %v982 = vadd.f32 %v654, %v980
    %v983 = vtanh.pop %v982
    %v984 = vsub.f32 1.0, %v972
    %986 = vrot.lane.b32.xlu0 %v983, 96
    %v987 = vpop.permute.xlu0 %986
    %v989 = vmul.f32 %v984, %v987
    %v990 = vmul.f32 %v972, %v893
    %v991 = vadd.f32 %v989, %v990
    %v992 = vpack.c.bf16 %v991, %v991
    %v993 = vunpack.c.l.bf16 %v992
    %v994 = vsub.f32 %v991, %v993
    %v995 = vpack.c.bf16 %v994, %v994
    %v997 = vunpack.c.l.b16 %v992
    %v998 = vpack.c.b16 %v997, %v997
    %999 = vrot.lane.b32.xlu0 %v998, 96
    %v1000 = vpop.permute.xlu0 %999
    %v1002 = vsel %vm697, %v1000, 0
    %1004 = vmatpush.bf16.msra.mxu0 0
    %1005 = vmatpush.bf16.msra.mxu0 0
    %1006 = vmatpush.bf16.msra.mxu0 0
    %1007 = vmatpush.bf16.msra.mxu0 0
    %1008 = vmatpush.bf16.msra.mxu0 0
    %1009 = vmatpush.bf16.msra.mxu0 0
    %1010 = vmatpush.bf16.msra.mxu0 %v694
    %1011 = vmatpush.bf16.msra.mxu0 %v693
    %1012 = vmatmul.bf16.gmra.mxu0 %v1002
    %v1013 = vpop.f32.mrf.mxu0
    %v1014 = vadd.f32 0.0, %v1013
    %v1015 = vpop.f32.mrf.mxu0
    %1016 = vdwg.mxu0
    %1017 = vmatpush.bf16.msra.mxu0 0
    %1018 = vmatpush.bf16.msra.mxu0 0
    %1019 = vmatpush.bf16.msra.mxu0 0
    %1020 = vmatpush.bf16.msra.mxu0 0
    %1021 = vmatpush.bf16.msra.mxu0 0
    %1022 = vmatpush.bf16.msra.mxu0 0
    %1023 = vmatpush.bf16.msra.mxu0 %v723
    %1024 = vmatpush.bf16.msra.mxu0 %v722
    %1025 = vmatmul.bf16.gmra.mxu0 %v1002
    %v1026 = vpop.f32.mrf.mxu0
    %v1027 = vadd.f32 %v1014, %v1026
    %v1028 = vpop.f32.mrf.mxu0
    %1029 = vdwg.mxu0
    %1031 = vrot.lane.b32.xlu0 %v995, 96
    %v1032 = vpop.permute.xlu0 %1031
    %v1034 = vsel %vm697, %v1032, 0
    %1036 = vmatpush.bf16.msra.mxu0 0
    %1037 = vmatpush.bf16.msra.mxu0 0
    %1038 = vmatpush.bf16.msra.mxu0 0
    %1039 = vmatpush.bf16.msra.mxu0 0
    %1040 = vmatpush.bf16.msra.mxu0 0
    %1041 = vmatpush.bf16.msra.mxu0 0
    %1042 = vmatpush.bf16.msra.mxu0 %v723
    %1043 = vmatpush.bf16.msra.mxu0 %v722
    %1044 = vmatmul.bf16.gmra.mxu0 %v1034
    %v1045 = vpop.f32.mrf.mxu0
    %v1046 = vadd.f32 0.0, %v1045
    %v1047 = vpop.f32.mrf.mxu0
    %1048 = vdwg.mxu0
    %v1049 = vadd.f32 %v1027, %v1046
    %v1050 = vadd.f32 %v1049, %v754
    %v1051 = vadd.f32 %v658, %v1050
    %v1052 = vxor.u32 %v1051, 2147483648
    %v1053 = vmul.f32 %v1052, 1.442695
    %v1054 = vpow.pop %v1053
    %v1055 = vadd.f32 %v1054, 1.0
    %v1056 = vrcp.pop %v1055
    %v1057 = vmul.f32 %v1055, %v1056
    %v1058 = vsub.f32 1.0, %v1057
    %v1059 = vmul.f32 %v1056, %v1058
    %v1060 = vadd.f32 %v1056, %v1059
    %vm1061 = vweird.f32 %v1055
    %vm1062 = vweird.f32 %v1056
    %vm1063 = vmor %vm1061, %vm1062
    %v1064 = vsel %vm1063, %v1056, %v1060
    %v1065 = vand.u32 2147483647, %v1055
    %vm1066 = vcmp.eq.f32.partialorder %v1065, 8.507059e+37
    %v1067 = vand.u32 %v1055, 2147483648
    %v1068 = vor.u32 1.1754944e-38, %v1067
    %v1069 = vsel %vm1066, %v1068, %v1064
    %v1070 = vmul.f32 1.0, %v1069
    %1072 = vrot.lane.b32.xlu0 %v1050, 64
    %v1073 = vpop.permute.xlu0 %1072
    %v1075 = vmul.f32 %v1070, %v1073
    %1077 = vrot.lane.b32.xlu0 %v1075, 64
    %v1078 = vpop.permute.xlu0 %1077
    %v1080 = vadd.f32 %v658, %v1078
    %v1081 = vtanh.pop %v1080
    %v1082 = vsub.f32 1.0, %v1070
    %1084 = vrot.lane.b32.xlu0 %v1081, 96
    %v1085 = vpop.permute.xlu0 %1084
    %v1087 = vmul.f32 %v1082, %v1085
    %v1088 = vmul.f32 %v1070, %v991
    %v1089 = vadd.f32 %v1087, %v1088
    %v1090 = vpack.c.bf16 %v1089, %v1089
    %v1091 = vunpack.c.l.bf16 %v1090
    %v1092 = vsub.f32 %v1089, %v1091
    %v1093 = vpack.c.bf16 %v1092, %v1092
    %v1095 = vunpack.c.l.b16 %v1090
    %v1096 = vpack.c.b16 %v1095, %v1095
    %1097 = vrot.lane.b32.xlu0 %v1096, 96
    %v1098 = vpop.permute.xlu0 %1097
    %v1100 = vsel %vm697, %v1098, 0
    %1102 = vmatpush.bf16.msra.mxu0 0
    %1103 = vmatpush.bf16.msra.mxu0 0
    %1104 = vmatpush.bf16.msra.mxu0 0
    %1105 = vmatpush.bf16.msra.mxu0 0
    %1106 = vmatpush.bf16.msra.mxu0 0
    %1107 = vmatpush.bf16.msra.mxu0 0
    %1108 = vmatpush.bf16.msra.mxu0 %v694
    %1109 = vmatpush.bf16.msra.mxu0 %v693
    %1110 = vmatmul.bf16.gmra.mxu0 %v1100
    %v1111 = vpop.f32.mrf.mxu0
    %v1112 = vadd.f32 0.0, %v1111
    %v1113 = vpop.f32.mrf.mxu0
    %1114 = vdwg.mxu0
    %1115 = vmatpush.bf16.msra.mxu0 0
    %1116 = vmatpush.bf16.msra.mxu0 0
    %1117 = vmatpush.bf16.msra.mxu0 0
    %1118 = vmatpush.bf16.msra.mxu0 0
    %1119 = vmatpush.bf16.msra.mxu0 0
    %1120 = vmatpush.bf16.msra.mxu0 0
    %1121 = vmatpush.bf16.msra.mxu0 %v723
    %1122 = vmatpush.bf16.msra.mxu0 %v722
    %1123 = vmatmul.bf16.gmra.mxu0 %v1100
    %v1124 = vpop.f32.mrf.mxu0
    %v1125 = vadd.f32 %v1112, %v1124
    %v1126 = vpop.f32.mrf.mxu0
    %1127 = vdwg.mxu0
    %1129 = vrot.lane.b32.xlu0 %v1093, 96
    %v1130 = vpop.permute.xlu0 %1129
    %v1132 = vsel %vm697, %v1130, 0
    %1134 = vmatpush.bf16.msra.mxu0 0
    %1135 = vmatpush.bf16.msra.mxu0 0
    %1136 = vmatpush.bf16.msra.mxu0 0
    %1137 = vmatpush.bf16.msra.mxu0 0
    %1138 = vmatpush.bf16.msra.mxu0 0
    %1139 = vmatpush.bf16.msra.mxu0 0
    %1140 = vmatpush.bf16.msra.mxu0 %v723
    %1141 = vmatpush.bf16.msra.mxu0 %v722
    %1142 = vmatmul.bf16.gmra.mxu0 %v1132
    %v1143 = vpop.f32.mrf.mxu0
    %v1144 = vadd.f32 0.0, %v1143
    %v1145 = vpop.f32.mrf.mxu0
    %1146 = vdwg.mxu0
    %v1147 = vadd.f32 %v1125, %v1144
    %v1148 = vadd.f32 %v1147, %v754
    %v1149 = vadd.f32 %v662, %v1148
    %v1150 = vxor.u32 %v1149, 2147483648
    %v1151 = vmul.f32 %v1150, 1.442695
    %v1152 = vpow.pop %v1151
    %v1153 = vadd.f32 %v1152, 1.0
    %v1154 = vrcp.pop %v1153
    %v1155 = vmul.f32 %v1153, %v1154
    %v1156 = vsub.f32 1.0, %v1155
    %v1157 = vmul.f32 %v1154, %v1156
    %v1158 = vadd.f32 %v1154, %v1157
    %vm1159 = vweird.f32 %v1153
    %vm1160 = vweird.f32 %v1154
    %vm1161 = vmor %vm1159, %vm1160
    %v1162 = vsel %vm1161, %v1154, %v1158
    %v1163 = vand.u32 2147483647, %v1153
    %vm1164 = vcmp.eq.f32.partialorder %v1163, 8.507059e+37
    %v1165 = vand.u32 %v1153, 2147483648
    %v1166 = vor.u32 1.1754944e-38, %v1165
    %v1167 = vsel %vm1164, %v1166, %v1162
    %v1168 = vmul.f32 1.0, %v1167
    %1170 = vrot.lane.b32.xlu0 %v1148, 64
    %v1171 = vpop.permute.xlu0 %1170
    %v1173 = vmul.f32 %v1168, %v1171
    %1175 = vrot.lane.b32.xlu0 %v1173, 64
    %v1176 = vpop.permute.xlu0 %1175
    %v1178 = vadd.f32 %v662, %v1176
    %v1179 = vtanh.pop %v1178
    %v1180 = vsub.f32 1.0, %v1168
    %1182 = vrot.lane.b32.xlu0 %v1179, 96
    %v1183 = vpop.permute.xlu0 %1182
    %v1185 = vmul.f32 %v1180, %v1183
    %v1186 = vmul.f32 %v1168, %v1089
    %v1187 = vadd.f32 %v1185, %v1186
    %v1188 = vpack.c.bf16 %v1187, %v1187
    %v1189 = vunpack.c.l.bf16 %v1188
    %v1190 = vsub.f32 %v1187, %v1189
    %v1191 = vpack.c.bf16 %v1190, %v1190
    %v1193 = vunpack.c.l.b16 %v1188
    %v1194 = vpack.c.b16 %v1193, %v1193
    %1195 = vrot.lane.b32.xlu0 %v1194, 96
    %v1196 = vpop.permute.xlu0 %1195
    %v1198 = vsel %vm697, %v1196, 0
    %1200 = vmatpush.bf16.msra.mxu0 0
    %1201 = vmatpush.bf16.msra.mxu0 0
    %1202 = vmatpush.bf16.msra.mxu0 0
    %1203 = vmatpush.bf16.msra.mxu0 0
    %1204 = vmatpush.bf16.msra.mxu0 0
    %1205 = vmatpush.bf16.msra.mxu0 0
    %1206 = vmatpush.bf16.msra.mxu0 %v694
    %1207 = vmatpush.bf16.msra.mxu0 %v693
    %1208 = vmatmul.bf16.gmra.mxu0 %v1198
    %v1209 = vpop.f32.mrf.mxu0
    %v1210 = vadd.f32 0.0, %v1209
    %v1211 = vpop.f32.mrf.mxu0
    %1212 = vdwg.mxu0
    %1213 = vmatpush.bf16.msra.mxu0 0
    %1214 = vmatpush.bf16.msra.mxu0 0
    %1215 = vmatpush.bf16.msra.mxu0 0
    %1216 = vmatpush.bf16.msra.mxu0 0
    %1217 = vmatpush.bf16.msra.mxu0 0
    %1218 = vmatpush.bf16.msra.mxu0 0
    %1219 = vmatpush.bf16.msra.mxu0 %v723
    %1220 = vmatpush.bf16.msra.mxu0 %v722
    %1221 = vmatmul.bf16.gmra.mxu0 %v1198
    %v1222 = vpop.f32.mrf.mxu0
    %v1223 = vadd.f32 %v1210, %v1222
    %v1224 = vpop.f32.mrf.mxu0
    %1225 = vdwg.mxu0
    %1227 = vrot.lane.b32.xlu0 %v1191, 96
    %v1228 = vpop.permute.xlu0 %1227
    %v1230 = vsel %vm697, %v1228, 0
    %1232 = vmatpush.bf16.msra.mxu0 0
    %1233 = vmatpush.bf16.msra.mxu0 0
    %1234 = vmatpush.bf16.msra.mxu0 0
    %1235 = vmatpush.bf16.msra.mxu0 0
    %1236 = vmatpush.bf16.msra.mxu0 0
    %1237 = vmatpush.bf16.msra.mxu0 0
    %1238 = vmatpush.bf16.msra.mxu0 %v723
    %1239 = vmatpush.bf16.msra.mxu0 %v722
    %1240 = vmatmul.bf16.gmra.mxu0 %v1230
    %v1241 = vpop.f32.mrf.mxu0
    %v1242 = vadd.f32 0.0, %v1241
    %v1243 = vpop.f32.mrf.mxu0
    %1244 = vdwg.mxu0
    %v1245 = vadd.f32 %v1223, %v1242
    %v1246 = vadd.f32 %v1245, %v754
    %v1247 = vadd.f32 %v666, %v1246
    %v1248 = vxor.u32 %v1247, 2147483648
    %v1249 = vmul.f32 %v1248, 1.442695
    %v1250 = vpow.pop %v1249
    %v1251 = vadd.f32 %v1250, 1.0
    %v1252 = vrcp.pop %v1251
    %v1253 = vmul.f32 %v1251, %v1252
    %v1254 = vsub.f32 1.0, %v1253
    %v1255 = vmul.f32 %v1252, %v1254
    %v1256 = vadd.f32 %v1252, %v1255
    %vm1257 = vweird.f32 %v1251
    %vm1258 = vweird.f32 %v1252
    %vm1259 = vmor %vm1257, %vm1258
    %v1260 = vsel %vm1259, %v1252, %v1256
    %v1261 = vand.u32 2147483647, %v1251
    %vm1262 = vcmp.eq.f32.partialorder %v1261, 8.507059e+37
    %v1263 = vand.u32 %v1251, 2147483648
    %v1264 = vor.u32 1.1754944e-38, %v1263
    %v1265 = vsel %vm1262, %v1264, %v1260
    %v1266 = vmul.f32 1.0, %v1265
    %1268 = vrot.lane.b32.xlu0 %v1246, 64
    %v1269 = vpop.permute.xlu0 %1268
    %v1271 = vmul.f32 %v1266, %v1269
    %1273 = vrot.lane.b32.xlu0 %v1271, 64
    %v1274 = vpop.permute.xlu0 %1273
    %v1276 = vadd.f32 %v666, %v1274
    %v1277 = vtanh.pop %v1276
    %v1278 = vsub.f32 1.0, %v1266
    %1280 = vrot.lane.b32.xlu0 %v1277, 96
    %v1281 = vpop.permute.xlu0 %1280
    %v1283 = vmul.f32 %v1278, %v1281
    %v1284 = vmul.f32 %v1266, %v1187
    %v1285 = vadd.f32 %v1283, %v1284
    %v1286 = vpack.c.bf16 %v1285, %v1285
    %v1287 = vunpack.c.l.bf16 %v1286
    %v1288 = vsub.f32 %v1285, %v1287
    %v1289 = vpack.c.bf16 %v1288, %v1288
    %v1291 = vunpack.c.l.b16 %v1286
    %v1292 = vpack.c.b16 %v1291, %v1291
    %1293 = vrot.lane.b32.xlu0 %v1292, 96
    %v1294 = vpop.permute.xlu0 %1293
    %v1296 = vsel %vm697, %v1294, 0
    %1298 = vmatpush.bf16.msra.mxu0 0
    %1299 = vmatpush.bf16.msra.mxu0 0
    %1300 = vmatpush.bf16.msra.mxu0 0
    %1301 = vmatpush.bf16.msra.mxu0 0
    %1302 = vmatpush.bf16.msra.mxu0 0
    %1303 = vmatpush.bf16.msra.mxu0 0
    %1304 = vmatpush.bf16.msra.mxu0 %v694
    %1305 = vmatpush.bf16.msra.mxu0 %v693
    %1306 = vmatmul.bf16.gmra.mxu0 %v1296
    %v1307 = vpop.f32.mrf.mxu0
    %v1308 = vadd.f32 0.0, %v1307
    %v1309 = vpop.f32.mrf.mxu0
    %1310 = vdwg.mxu0
    %1311 = vmatpush.bf16.msra.mxu0 0
    %1312 = vmatpush.bf16.msra.mxu0 0
    %1313 = vmatpush.bf16.msra.mxu0 0
    %1314 = vmatpush.bf16.msra.mxu0 0
    %1315 = vmatpush.bf16.msra.mxu0 0
    %1316 = vmatpush.bf16.msra.mxu0 0
    %1317 = vmatpush.bf16.msra.mxu0 %v723
    %1318 = vmatpush.bf16.msra.mxu0 %v722
    %1319 = vmatmul.bf16.gmra.mxu0 %v1296
    %v1320 = vpop.f32.mrf.mxu0
    %v1321 = vadd.f32 %v1308, %v1320
    %v1322 = vpop.f32.mrf.mxu0
    %1323 = vdwg.mxu0
    %1325 = vrot.lane.b32.xlu0 %v1289, 96
    %v1326 = vpop.permute.xlu0 %1325
    %v1328 = vsel %vm697, %v1326, 0
    %1330 = vmatpush.bf16.msra.mxu0 0
    %1331 = vmatpush.bf16.msra.mxu0 0
    %1332 = vmatpush.bf16.msra.mxu0 0
    %1333 = vmatpush.bf16.msra.mxu0 0
    %1334 = vmatpush.bf16.msra.mxu0 0
    %1335 = vmatpush.bf16.msra.mxu0 0
    %1336 = vmatpush.bf16.msra.mxu0 %v723
    %1337 = vmatpush.bf16.msra.mxu0 %v722
    %1338 = vmatmul.bf16.gmra.mxu0 %v1328
    %v1339 = vpop.f32.mrf.mxu0
    %v1340 = vadd.f32 0.0, %v1339
    %v1341 = vpop.f32.mrf.mxu0
    %1342 = vdwg.mxu0
    %v1343 = vadd.f32 %v1321, %v1340
    %v1344 = vadd.f32 %v1343, %v754
    %v1345 = vadd.f32 %v670, %v1344
    %v1346 = vxor.u32 %v1345, 2147483648
    %v1347 = vmul.f32 %v1346, 1.442695
    %v1348 = vpow.pop %v1347
    %v1349 = vadd.f32 %v1348, 1.0
    %v1350 = vrcp.pop %v1349
    %v1351 = vmul.f32 %v1349, %v1350
    %v1352 = vsub.f32 1.0, %v1351
    %v1353 = vmul.f32 %v1350, %v1352
    %v1354 = vadd.f32 %v1350, %v1353
    %vm1355 = vweird.f32 %v1349
    %vm1356 = vweird.f32 %v1350
    %vm1357 = vmor %vm1355, %vm1356
    %v1358 = vsel %vm1357, %v1350, %v1354
    %v1359 = vand.u32 2147483647, %v1349
    %vm1360 = vcmp.eq.f32.partialorder %v1359, 8.507059e+37
    %v1361 = vand.u32 %v1349, 2147483648
    %v1362 = vor.u32 1.1754944e-38, %v1361
    %v1363 = vsel %vm1360, %v1362, %v1358
    %v1364 = vmul.f32 1.0, %v1363
    %1366 = vrot.lane.b32.xlu0 %v1344, 64
    %v1367 = vpop.permute.xlu0 %1366
    %v1369 = vmul.f32 %v1364, %v1367
    %1371 = vrot.lane.b32.xlu0 %v1369, 64
    %v1372 = vpop.permute.xlu0 %1371
    %v1374 = vadd.f32 %v670, %v1372
    %v1375 = vtanh.pop %v1374
    %v1376 = vsub.f32 1.0, %v1364
    %1378 = vrot.lane.b32.xlu0 %v1375, 96
    %v1379 = vpop.permute.xlu0 %1378
    %v1381 = vmul.f32 %v1376, %v1379
    %v1382 = vmul.f32 %v1364, %v1285
    %v1383 = vadd.f32 %v1381, %v1382
    %v1384 = vpack.c.bf16 %v1383, %v1383
    %v1385 = vunpack.c.l.bf16 %v1384
    %v1386 = vsub.f32 %v1383, %v1385
    %v1387 = vpack.c.bf16 %v1386, %v1386
    %v1389 = vunpack.c.l.b16 %v1384
    %v1390 = vpack.c.b16 %v1389, %v1389
    %1391 = vrot.lane.b32.xlu0 %v1390, 96
    %v1392 = vpop.permute.xlu0 %1391
    %v1394 = vsel %vm697, %v1392, 0
    %1396 = vmatpush.bf16.msra.mxu0 0
    %1397 = vmatpush.bf16.msra.mxu0 0
    %1398 = vmatpush.bf16.msra.mxu0 0
    %1399 = vmatpush.bf16.msra.mxu0 0
    %1400 = vmatpush.bf16.msra.mxu0 0
    %1401 = vmatpush.bf16.msra.mxu0 0
    %1402 = vmatpush.bf16.msra.mxu0 %v694
    %1403 = vmatpush.bf16.msra.mxu0 %v693
    %1404 = vmatmul.bf16.gmra.mxu0 %v1394
    %v1405 = vpop.f32.mrf.mxu0
    %v1406 = vadd.f32 0.0, %v1405
    %v1407 = vpop.f32.mrf.mxu0
    %1408 = vdwg.mxu0
    %1409 = vmatpush.bf16.msra.mxu0 0
    %1410 = vmatpush.bf16.msra.mxu0 0
    %1411 = vmatpush.bf16.msra.mxu0 0
    %1412 = vmatpush.bf16.msra.mxu0 0
    %1413 = vmatpush.bf16.msra.mxu0 0
    %1414 = vmatpush.bf16.msra.mxu0 0
    %1415 = vmatpush.bf16.msra.mxu0 %v723
    %1416 = vmatpush.bf16.msra.mxu0 %v722
    %1417 = vmatmul.bf16.gmra.mxu0 %v1394
    %v1418 = vpop.f32.mrf.mxu0
    %v1419 = vadd.f32 %v1406, %v1418
    %v1420 = vpop.f32.mrf.mxu0
    %1421 = vdwg.mxu0
    %1423 = vrot.lane.b32.xlu0 %v1387, 96
    %v1424 = vpop.permute.xlu0 %1423
    %v1426 = vsel %vm697, %v1424, 0
    %1428 = vmatpush.bf16.msra.mxu0 0
    %1429 = vmatpush.bf16.msra.mxu0 0
    %1430 = vmatpush.bf16.msra.mxu0 0
    %1431 = vmatpush.bf16.msra.mxu0 0
    %1432 = vmatpush.bf16.msra.mxu0 0
    %1433 = vmatpush.bf16.msra.mxu0 0
    %1434 = vmatpush.bf16.msra.mxu0 %v723
    %1435 = vmatpush.bf16.msra.mxu0 %v722
    %1436 = vmatmul.bf16.gmra.mxu0 %v1426
    %v1437 = vpop.f32.mrf.mxu0
    %v1438 = vadd.f32 0.0, %v1437
    %v1439 = vpop.f32.mrf.mxu0
    %1440 = vdwg.mxu0
    %v1441 = vadd.f32 %v1419, %v1438
    %v1442 = vadd.f32 %v1441, %v754
    %v1443 = vadd.f32 %v674, %v1442
    %v1444 = vxor.u32 %v1443, 2147483648
    %v1445 = vmul.f32 %v1444, 1.442695
    %v1446 = vpow.pop %v1445
    %v1447 = vadd.f32 %v1446, 1.0
    %v1448 = vrcp.pop %v1447
    %v1449 = vmul.f32 %v1447, %v1448
    %v1450 = vsub.f32 1.0, %v1449
    %v1451 = vmul.f32 %v1448, %v1450
    %v1452 = vadd.f32 %v1448, %v1451
    %vm1453 = vweird.f32 %v1447
    %vm1454 = vweird.f32 %v1448
    %vm1455 = vmor %vm1453, %vm1454
    %v1456 = vsel %vm1455, %v1448, %v1452
    %v1457 = vand.u32 2147483647, %v1447
    %vm1458 = vcmp.eq.f32.partialorder %v1457, 8.507059e+37
    %v1459 = vand.u32 %v1447, 2147483648
    %v1460 = vor.u32 1.1754944e-38, %v1459
    %v1461 = vsel %vm1458, %v1460, %v1456
    %v1462 = vmul.f32 1.0, %v1461
    %1464 = vrot.lane.b32.xlu0 %v1442, 64
    %v1465 = vpop.permute.xlu0 %1464
    %v1467 = vmul.f32 %v1462, %v1465
    %1469 = vrot.lane.b32.xlu0 %v1467, 64
    %v1470 = vpop.permute.xlu0 %1469
    %v1472 = vadd.f32 %v674, %v1470
    %v1473 = vtanh.pop %v1472
    %v1474 = vsub.f32 1.0, %v1462
    %1476 = vrot.lane.b32.xlu0 %v1473, 96
    %v1477 = vpop.permute.xlu0 %1476
    %v1479 = vmul.f32 %v1474, %v1477
    %v1480 = vmul.f32 %v1462, %v1383
    %v1481 = vadd.f32 %v1479, %v1480
    %v1482 = vld [vmem:[%s5] sm:$0xff]
    %v1483 = vld [vmem:[%s5 + $0x8] sm:$0xff]
    %v1484 = vld [vmem:[%s5 + $0x10] sm:$0xff]
    %v1485 = vld [vmem:[%s5 + $0x18] sm:$0xff]
    %v1486 = vld [vmem:[%s6] sm:$0x1]
    %v1488 = vperm.slane %v1486, 0
    %1491 = vrot.lane.b32.xlu0 %v1481, 96
    %v1492 = vpop.permute.xlu0 %1491
    %v1493 = vsel %vm697, %v1492, 0
    %1495 = vmatpush.msra.mxu0 0.0
    %1496 = vmatpush.msra.mxu0 0.0
    %1497 = vmatpush.msra.mxu0 0.0
    %1498 = vmatpush.msra.mxu0 0.0
    %1499 = vmatpush.msra.mxu0 0.0
    %1500 = vmatpush.msra.mxu0 0.0
    %1501 = vmatpush.msra.mxu0 0.0
    %1502 = vmatpush.msra.mxu0 0.0
    %1503 = vmatpush.msra.mxu0 0.0
    %1504 = vmatpush.msra.mxu0 0.0
    %1505 = vmatpush.msra.mxu0 0.0
    %1506 = vmatpush.msra.mxu0 0.0
    %v1507 = vand.u32 %v1485, 4294901760
    %1508 = vmatpush.msra.mxu0 %v1507
    %v1509 = vand.u32 %v1484, 4294901760
    %1510 = vmatpush.msra.mxu0 %v1509
    %v1511 = vand.u32 %v1483, 4294901760
    %1512 = vmatpush.msra.mxu0 %v1511
    %v1513 = vand.u32 %v1482, 4294901760
    %1514 = vmatpush.msra.mxu0 %v1513
    %v1515 = vand.u32 %v1493, 4294901760
    %v1516 = vsub.f32 %v1493, %v1515
    %v1517 = vand.u32 %v1516, 4294901760
    %v1518 = vsub.f32 %v1516, %v1517
    %v1519 = vand.u32 %v1518, 4294901760
    %1520 = vmatmul.f32.gmra.mxu0 %v1519
    %v1521 = vpop.f32.mrf.mxu0
    %v1522 = vadd.f32 %v1488, %v1521
    %1523 = vdwg.mxu0
    %1524 = vmatpush.msra.mxu0 0.0
    %1525 = vmatpush.msra.mxu0 0.0
    %1526 = vmatpush.msra.mxu0 0.0
    %1527 = vmatpush.msra.mxu0 0.0
    %1528 = vmatpush.msra.mxu0 0.0
    %1529 = vmatpush.msra.mxu0 0.0
    %1530 = vmatpush.msra.mxu0 0.0
    %1531 = vmatpush.msra.mxu0 0.0
    %1532 = vmatpush.msra.mxu0 0.0
    %1533 = vmatpush.msra.mxu0 0.0
    %1534 = vmatpush.msra.mxu0 0.0
    %1535 = vmatpush.msra.mxu0 0.0
    %v1536 = vand.u32 %v1485, 4294901760
    %v1537 = vsub.f32 %v1485, %v1536
    %v1538 = vand.u32 %v1537, 4294901760
    %v1539 = vsub.f32 %v1537, %v1538
    %v1540 = vand.u32 %v1539, 4294901760
    %1541 = vmatpush.msra.mxu0 %v1540
    %v1542 = vand.u32 %v1484, 4294901760
    %v1543 = vsub.f32 %v1484, %v1542
    %v1544 = vand.u32 %v1543, 4294901760
    %v1545 = vsub.f32 %v1543, %v1544
    %v1546 = vand.u32 %v1545, 4294901760
    %1547 = vmatpush.msra.mxu0 %v1546
    %v1548 = vand.u32 %v1483, 4294901760
    %v1549 = vsub.f32 %v1483, %v1548
    %v1550 = vand.u32 %v1549, 4294901760
    %v1551 = vsub.f32 %v1549, %v1550
    %v1552 = vand.u32 %v1551, 4294901760
    %1553 = vmatpush.msra.mxu0 %v1552
    %v1554 = vand.u32 %v1482, 4294901760
    %v1555 = vsub.f32 %v1482, %v1554
    %v1556 = vand.u32 %v1555, 4294901760
    %v1557 = vsub.f32 %v1555, %v1556
    %v1558 = vand.u32 %v1557, 4294901760
    %1559 = vmatpush.msra.mxu0 %v1558
    %v1560 = vand.u32 %v1493, 4294901760
    %1561 = vmatmul.f32.gmra.mxu0 %v1560
    %v1562 = vpop.f32.mrf.mxu0
    %v1563 = vadd.f32 %v1522, %v1562
    %1564 = vdwg.mxu0
    %1565 = vmatpush.msra.mxu0 0.0
    %1566 = vmatpush.msra.mxu0 0.0
    %1567 = vmatpush.msra.mxu0 0.0
    %1568 = vmatpush.msra.mxu0 0.0
    %1569 = vmatpush.msra.mxu0 0.0
    %1570 = vmatpush.msra.mxu0 0.0
    %1571 = vmatpush.msra.mxu0 0.0
    %1572 = vmatpush.msra.mxu0 0.0
    %1573 = vmatpush.msra.mxu0 0.0
    %1574 = vmatpush.msra.mxu0 0.0
    %1575 = vmatpush.msra.mxu0 0.0
    %1576 = vmatpush.msra.mxu0 0.0
    %v1577 = vand.u32 %v1485, 4294901760
    %v1578 = vsub.f32 %v1485, %v1577
    %1579 = vmatpush.msra.mxu0 %v1578
    %v1580 = vand.u32 %v1484, 4294901760
    %v1581 = vsub.f32 %v1484, %v1580
    %1582 = vmatpush.msra.mxu0 %v1581
    %v1583 = vand.u32 %v1483, 4294901760
    %v1584 = vsub.f32 %v1483, %v1583
    %1585 = vmatpush.msra.mxu0 %v1584
    %v1586 = vand.u32 %v1482, 4294901760
    %v1587 = vsub.f32 %v1482, %v1586
    %1588 = vmatpush.msra.mxu0 %v1587
    %v1589 = vand.u32 %v1493, 4294901760
    %v1590 = vsub.f32 %v1493, %v1589
    %1591 = vmatmul.f32.gmra.mxu0 %v1590
    %v1592 = vpop.f32.mrf.mxu0
    %v1593 = vadd.f32 %v1563, %v1592
    %1594 = vdwg.mxu0
    %1595 = vmatpush.msra.mxu0 0.0
    %1596 = vmatpush.msra.mxu0 0.0
    %1597 = vmatpush.msra.mxu0 0.0
    %1598 = vmatpush.msra.mxu0 0.0
    %1599 = vmatpush.msra.mxu0 0.0
    %1600 = vmatpush.msra.mxu0 0.0
    %1601 = vmatpush.msra.mxu0 0.0
    %1602 = vmatpush.msra.mxu0 0.0
    %1603 = vmatpush.msra.mxu0 0.0
    %1604 = vmatpush.msra.mxu0 0.0
    %1605 = vmatpush.msra.mxu0 0.0
    %1606 = vmatpush.msra.mxu0 0.0
    %v1607 = vand.u32 %v1485, 4294901760
    %1608 = vmatpush.msra.mxu0 %v1607
    %v1609 = vand.u32 %v1484, 4294901760
    %1610 = vmatpush.msra.mxu0 %v1609
    %v1611 = vand.u32 %v1483, 4294901760
    %1612 = vmatpush.msra.mxu0 %v1611
    %v1613 = vand.u32 %v1482, 4294901760
    %1614 = vmatpush.msra.mxu0 %v1613
    %v1615 = vand.u32 %v1493, 4294901760
    %v1616 = vsub.f32 %v1493, %v1615
    %v1617 = vand.u32 %v1616, 4294901760
    %1618 = vmatmul.f32.gmra.mxu0 %v1617
    %v1619 = vpop.f32.mrf.mxu0
    %v1620 = vadd.f32 %v1593, %v1619
    %1621 = vdwg.mxu0
    %1622 = vmatpush.msra.mxu0 0.0
    %1623 = vmatpush.msra.mxu0 0.0
    %1624 = vmatpush.msra.mxu0 0.0
    %1625 = vmatpush.msra.mxu0 0.0
    %1626 = vmatpush.msra.mxu0 0.0
    %1627 = vmatpush.msra.mxu0 0.0
    %1628 = vmatpush.msra.mxu0 0.0
    %1629 = vmatpush.msra.mxu0 0.0
    %1630 = vmatpush.msra.mxu0 0.0
    %1631 = vmatpush.msra.mxu0 0.0
    %1632 = vmatpush.msra.mxu0 0.0
    %1633 = vmatpush.msra.mxu0 0.0
    %v1634 = vand.u32 %v1485, 4294901760
    %v1635 = vsub.f32 %v1485, %v1634
    %v1636 = vand.u32 %v1635, 4294901760
    %1637 = vmatpush.msra.mxu0 %v1636
    %v1638 = vand.u32 %v1484, 4294901760
    %v1639 = vsub.f32 %v1484, %v1638
    %v1640 = vand.u32 %v1639, 4294901760
    %1641 = vmatpush.msra.mxu0 %v1640
    %v1642 = vand.u32 %v1483, 4294901760
    %v1643 = vsub.f32 %v1483, %v1642
    %v1644 = vand.u32 %v1643, 4294901760
    %1645 = vmatpush.msra.mxu0 %v1644
    %v1646 = vand.u32 %v1482, 4294901760
    %v1647 = vsub.f32 %v1482, %v1646
    %v1648 = vand.u32 %v1647, 4294901760
    %1649 = vmatpush.msra.mxu0 %v1648
    %v1650 = vand.u32 %v1493, 4294901760
    %1651 = vmatmul.f32.gmra.mxu0 %v1650
    %v1652 = vpop.f32.mrf.mxu0
    %v1653 = vadd.f32 %v1620, %v1652
    %1654 = vdwg.mxu0
    %1655 = vmatpush.msra.mxu0 0.0
    %1656 = vmatpush.msra.mxu0 0.0
    %1657 = vmatpush.msra.mxu0 0.0
    %1658 = vmatpush.msra.mxu0 0.0
    %1659 = vmatpush.msra.mxu0 0.0
    %1660 = vmatpush.msra.mxu0 0.0
    %1661 = vmatpush.msra.mxu0 0.0
    %1662 = vmatpush.msra.mxu0 0.0
    %1663 = vmatpush.msra.mxu0 0.0
    %1664 = vmatpush.msra.mxu0 0.0
    %1665 = vmatpush.msra.mxu0 0.0
    %1666 = vmatpush.msra.mxu0 0.0
    %v1667 = vand.u32 %v1485, 4294901760
    %1668 = vmatpush.msra.mxu0 %v1667
    %v1669 = vand.u32 %v1484, 4294901760
    %1670 = vmatpush.msra.mxu0 %v1669
    %v1671 = vand.u32 %v1483, 4294901760
    %1672 = vmatpush.msra.mxu0 %v1671
    %v1673 = vand.u32 %v1482, 4294901760
    %1674 = vmatpush.msra.mxu0 %v1673
    %v1675 = vand.u32 %v1493, 4294901760
    %1676 = vmatmul.f32.gmra.mxu0 %v1675
    %v1677 = vpop.f32.mrf.mxu0
    %v1678 = vadd.f32 %v1653, %v1677
    %1679 = vdwg.mxu0
    %1680 = vmax.xlane.f32.xlu0 %v1678
    %v1681 = vpop.xlane.xlu0 %1680
    %v1682 = vsub.f32 %v1678, %v1681
    %v1683 = vmul.f32 %v1682, 1.442695
    %v1684 = vpow.pop %v1683
    %1685 = vadd.xlane.f32.xlu0 %v1684
    %v1686 = vpop.xlane.xlu0 %1685
    %v1687 = vrcp.pop %v1686
    %v1688 = vmul.f32 %v1686, %v1687
    %v1689 = vsub.f32 1.0, %v1688
    %v1690 = vmul.f32 %v1687, %v1689
    %v1691 = vadd.f32 %v1687, %v1690
    %vm1692 = vweird.f32 %v1686
    %vm1693 = vweird.f32 %v1687
    %vm1694 = vmor %vm1692, %vm1693
    %v1695 = vsel %vm1694, %v1687, %v1691
    %v1696 = vand.u32 2147483647, %v1686
    %vm1697 = vcmp.eq.f32.partialorder %v1696, 8.507059e+37
    %v1698 = vand.u32 %v1686, 2147483648
    %v1699 = vor.u32 1.1754944e-38, %v1698
    %v1700 = vsel %vm1697, %v1699, %v1695
    %v1701 = vmul.f32 %v1684, %v1700
    %1702 = vst [vmem:[#allocation5] sm:$0xff] %v1701
    // Predicated region
    $region34: #{torch_model_forward.1} parent=1 // pred_check
      _
    $region35: #{torch_model_forward.1} parent=1 // pred_check_branch
      %1704 = sbr.rel (0) target = $region37
    $region36: #{torch_model_forward.1} parent=1 // pred_region
      %1706 = vsyncadd [#allocation4], 0
      %s1708 = sshll.u32 [#allocation5], 4
      %s1709 = int_to_ptr.vmem [resolvable:$true] %s1708
      %s1710 = sshll.u32 %s7, 4
      %s1711 = int_to_ptr.hbm [resolvable:$true] %s1710
      %1713 = dma.vmem_to_hbm [thread:$0]  %s1709, 128, %s1711, [#allocation4]
    $region37: #{torch_model_forward.1} parent=1 // pred_fallthru
      _
    // Predicated region
    $region38: #{torch_model_forward.1} parent=1 // pred_check
      _
    $region39: #{torch_model_forward.1} parent=1 // pred_check_branch
      %1715 = sbr.rel (0) target = $region41
    $region40: #{torch_model_forward.1} parent=1 // pred_region
      %1717 = dma.done [#allocation4], 128
    $region41: #{torch_model_forward.1} parent=1 // pred_fallthru
      _
    %1718 = vsyncpa [#allocation3], 1
    %1719 = vsyncpa [#allocation4], 1

</llo_original>
